<compile_context>
chip_gen: v7x
topology: tpu7x:2x2x1
jax: 0.10.0
libtpu: 0.0.40
codegen_flags: <defaults>
</compile_context>

<pallas_src>
import jax
import jax.numpy as jnp
from jax.experimental import pallas as pl
from jax.experimental.pallas import tpu as pltpu

IMAGE_SIZE = 28 * 28     # 784
HIDDEN_SIZE = 128
LATENT_DIM = 10


def _round_up(n, m):
    return ((n + m - 1) // m) * m


def _choose_tile_b(B, cap):
    """Batch tile (multiple of 8, <= cap) that keeps >=2 grid steps where
    possible (v7x megacore) and limits padded rows to <= ~12.5% (padded rows
    are pure wasted DMA in a memory-bound kernel)."""
    B8 = _round_up(B, 8)
    best = 8
    tb = 8
    while tb <= cap:
        Bp = _round_up(B8, tb)
        over = Bp - B8
        steps = Bp // tb
        if over * 8 <= B8 and (steps >= 2 or B8 <= 8):
            best = tb
        tb *= 2
    return best


def _vae_kernel(x_ref, eps_ref,
                w1_ref, b1_ref,
                wml_ref, bml_ref,
                w3_ref, b3_ref,
                w4_ref, b4_ref,
                recon_ref, ml_ref):
    # ---- encode ----
    # Cast to bf16 in-kernel (VPU cast is free under the memory-bound regime);
    # the wrapper never writes a bf16 copy of x back to HBM.
    x_bf = x_ref[...].astype(jnp.bfloat16)                          # (tb, 784)
    h1 = jnp.dot(x_bf, w1_ref[...],
                 preferred_element_type=jnp.float32) + b1_ref[...]
    h1 = jnp.maximum(h1, 0.0)                                       # ReLU, f32 (tb, 128)

    # Fused fc21 | fc22 -> (tb, 2*latent): [:, :L] = mu, [:, L:] = logvar.
    # Kept in f32: tiny (128x20) so it is <1% of FLOPs but keeps mu/logvar
    # (and any downstream KL exp(logvar)) out of bf16-level error.
    ml = jnp.dot(h1, wml_ref[...],
                 preferred_element_type=jnp.float32) + bml_ref[...]
    mu = ml[:, :LATENT_DIM]
    logvar = ml[:, LATENT_DIM:]

    # ---- reparameterize ----
    std = jnp.exp(0.5 * logvar)
    z = mu + eps_ref[...] * std                                     # f32 (tb, 10)

    # ---- decode ----
    h3 = jnp.dot(z, w3_ref[...],                                    # tiny 10x128, f32
                 preferred_element_type=jnp.float32) + b3_ref[...]
    h3 = jnp.maximum(h3, 0.0)                                       # f32 (tb, 128)

    logits = jnp.dot(h3.astype(jnp.bfloat16), w4_ref[...],
                     preferred_element_type=jnp.float32) + b4_ref[...]

    # Exact sigmoid: guaranteed in (0, 1) (approx reciprocal could exceed 1.0
    # and NaN a BCE log(1 - recon)); the EUP/VPU work is hidden under DMA.
    recon_ref[...] = jax.nn.sigmoid(logits).astype(recon_ref.dtype)
    ml_ref[...] = ml


def vae_forward(x, eps, params, *, tile_b=1024, recon_dtype=jnp.bfloat16):
    """x: (B, 1, 28, 28) or (B, 784) float32; eps: (B, latent_dim) float32.

    Returns (recon, mu, logvar).  recon is `recon_dtype` (bf16 by default to
    halve the dominant HBM writeback); mu/logvar are float32.
    """
    x2d = x.reshape(-1, IMAGE_SIZE).astype(jnp.float32)
    B = x2d.shape[0]

    (w1, b1, w21, b21, w22, b22, w3, b3, w4, b4) = params

    # Adaptive batch tile + zero-pad the batch to a multiple of it.
    tb = _choose_tile_b(B, tile_b)
    Bp = _round_up(B, tb)
    if Bp != B:
        x2d = jnp.pad(x2d, ((0, Bp - B), (0, 0)))
        eps = jnp.pad(eps, ((0, Bp - B), (0, 0)))

    # bf16 operands only for the two big matmuls; latent-path weights stay f32.
    w1_bf = w1.astype(jnp.bfloat16)
    w4_bf = w4.astype(jnp.bfloat16)
    wml = jnp.concatenate([w21, w22], axis=1)                       # (128, 2L) f32
    bml = jnp.concatenate([b21, b22], axis=1)                       # (1, 2L)  f32

    def full_spec(shape):
        # Constant block index -> Pallas revisit elision keeps these resident
        # in VMEM across grid steps (no per-step weight re-DMA).
        return pl.BlockSpec(shape, lambda i: (0, 0))

    grid = (Bp // tb,)
    in_specs = [
        pl.BlockSpec((tb, IMAGE_SIZE), lambda i: (i, 0)),       # x (f32)
        pl.BlockSpec((tb, LATENT_DIM), lambda i: (i, 0)),       # eps (f32)
        full_spec(w1_bf.shape), full_spec(b1.shape),
        full_spec(wml.shape), full_spec(bml.shape),
        full_spec(w3.shape), full_spec(b3.shape),
        full_spec(w4_bf.shape), full_spec(b4.shape),
    ]
    out_specs = [
        pl.BlockSpec((tb, IMAGE_SIZE), lambda i: (i, 0)),       # recon
        pl.BlockSpec((tb, 2 * LATENT_DIM), lambda i: (i, 0)),   # mu | logvar
    ]
    out_shape = [
        jax.ShapeDtypeStruct((Bp, IMAGE_SIZE), recon_dtype),
        jax.ShapeDtypeStruct((Bp, 2 * LATENT_DIM), jnp.float32),
    ]

    # Scoped-VMEM budget: double-buffered x/recon tiles + f32 intermediates.
    # Explicit so big tiles compile on v5e (16 MiB default) and stay well under
    # v7x's 64 MiB physical VMEM.
    vmem_limit = min(48 * 1024 * 1024,
                     10 * 1024 * 1024 + 26 * tb * IMAGE_SIZE)

    recon, ml = pl.pallas_call(
        _vae_kernel,
        out_shape=out_shape,
        grid_spec=pltpu.PrefetchScalarGridSpec(
            num_scalar_prefetch=0,
            grid=grid,
            in_specs=in_specs,
            out_specs=out_specs,
        ),
        compiler_params=pltpu.CompilerParams(
            dimension_semantics=("parallel",),
            vmem_limit_bytes=vmem_limit,
        ),
    )(x2d, eps, w1_bf, b1, wml, bml, w3, b3, w4_bf, b4)

    recon = recon[:B]
    mu = ml[:B, :LATENT_DIM]
    logvar = ml[:B, LATENT_DIM:]
    return recon, mu, logvar


def init_params(key):
    """Deterministic init mimicking torch.nn.Linear default U(-1/sqrt(fan_in), +)."""
    def linear(key, fan_in, fan_out):
        kw, kb = jax.random.split(key)
        bound = 1.0 / jnp.sqrt(fan_in)
        # stored as (in, out) so the kernel computes x @ W + b
        w = jax.random.uniform(kw, (fan_in, fan_out), jnp.float32, -bound, bound)
        b = jax.random.uniform(kb, (1, fan_out), jnp.float32, -bound, bound)
        return w, b

    k1, k21, k22, k3, k4 = jax.random.split(key, 5)
    w1, b1 = linear(k1, IMAGE_SIZE, HIDDEN_SIZE)      # fc1
    w21, b21 = linear(k21, HIDDEN_SIZE, LATENT_DIM)   # fc21 (mu)
    w22, b22 = linear(k22, HIDDEN_SIZE, LATENT_DIM)   # fc22 (logvar)
    w3, b3 = linear(k3, LATENT_DIM, HIDDEN_SIZE)      # fc3
    w4, b4 = linear(k4, HIDDEN_SIZE, IMAGE_SIZE)      # fc4
    return (w1, b1, w21, b21, w22, b22, w3, b3, w4, b4)


def _reference(x, eps, params):
    """Pure-JAX f32 reference replicating the PyTorch forward."""
    (w1, b1, w21, b21, w22, b22, w3, b3, w4, b4) = params
    x2d = x.reshape(-1, IMAGE_SIZE)
    h1 = jax.nn.relu(x2d @ w1 + b1)
    mu = h1 @ w21 + b21
    logvar = h1 @ w22 + b22
    z = mu + eps * jnp.exp(0.5 * logvar)
    h3 = jax.nn.relu(z @ w3 + b3)
    recon = jax.nn.sigmoid(h3 @ w4 + b4)
    return recon, mu, logvar


if __name__ == "__main__":
    key = jax.random.PRNGKey(0)
    kp, kx, ke = jax.random.split(key, 3)

    params = init_params(kp)

    B = 16
    x = jax.random.uniform(kx, (B, 1, 28, 28), jnp.float32)        # NCHW images
    eps = jax.random.normal(ke, (B, LATENT_DIM), jnp.float32)      # reparam noise

    recon, mu, logvar = jax.block_until_ready(
        jax.jit(vae_forward)(x, eps, params)
    )

    # bf16 fc1/fc4 operands + bf16 recon output -> compare at relaxed tolerance.
    r_recon, r_mu, r_logvar = _reference(x, eps, params)
    assert recon.shape == (B, IMAGE_SIZE)
    assert mu.shape == (B, LATENT_DIM) and logvar.shape == (B, LATENT_DIM)
    assert jnp.allclose(recon.astype(jnp.float32), r_recon, atol=5e-2, rtol=1e-2)
    assert jnp.allclose(mu, r_mu, atol=5e-2, rtol=1e-2)
    assert jnp.allclose(logvar, r_logvar, atol=5e-2, rtol=1e-2)
    assert jnp.all(jnp.isfinite(recon.astype(jnp.float32)))
    assert jnp.all((recon.astype(jnp.float32) >= 0.0) & (recon.astype(jnp.float32) <= 1.0))

    print("KERNEL_OK")
</pallas_src>

<mosaic_0001>
module attributes {stable_mosaic.version = 11 : i64} {
  func.func @_vae_kernel(%arg0: i32, %arg1: memref<8x784xf32, #tpu.memory_space<vmem>>, %arg2: memref<8x10xf32, #tpu.memory_space<vmem>>, %arg3: memref<784x128xbf16, #tpu.memory_space<vmem>>, %arg4: memref<1x128xf32, #tpu.memory_space<vmem>>, %arg5: memref<128x20xf32, #tpu.memory_space<vmem>>, %arg6: memref<1x20xf32, #tpu.memory_space<vmem>>, %arg7: memref<10x128xf32, #tpu.memory_space<vmem>>, %arg8: memref<1x128xf32, #tpu.memory_space<vmem>>, %arg9: memref<128x784xbf16, #tpu.memory_space<vmem>>, %arg10: memref<1x784xf32, #tpu.memory_space<vmem>>, %arg11: memref<8x784xbf16, #tpu.memory_space<vmem>>, %arg12: memref<8x20xf32, #tpu.memory_space<vmem>>) attributes {dimension_semantics = [#tpu.dimension_semantics<parallel>], iteration_bounds = array<i64: 2>, scalar_prefetch = 0 : i64, scratch_operands = 0 : i64, tpu.core_type = #tpu.core_type<tc>, window_params = [{transform_indices = @transform_0, window_bounds = array<i64: 8, 784>}, {transform_indices = @transform_1, window_bounds = array<i64: 8, 10>}, {pipeline_mode = #tpu.pipeline_mode<synchronous>, transform_indices = @transform_2, window_bounds = array<i64: 784, 128>}, {pipeline_mode = #tpu.pipeline_mode<synchronous>, transform_indices = @transform_3, window_bounds = array<i64: 1, 128>}, {pipeline_mode = #tpu.pipeline_mode<synchronous>, transform_indices = @transform_4, window_bounds = array<i64: 128, 20>}, {pipeline_mode = #tpu.pipeline_mode<synchronous>, transform_indices = @transform_5, window_bounds = array<i64: 1, 20>}, {pipeline_mode = #tpu.pipeline_mode<synchronous>, transform_indices = @transform_6, window_bounds = array<i64: 10, 128>}, {pipeline_mode = #tpu.pipeline_mode<synchronous>, transform_indices = @transform_7, window_bounds = array<i64: 1, 128>}, {pipeline_mode = #tpu.pipeline_mode<synchronous>, transform_indices = @transform_8, window_bounds = array<i64: 128, 784>}, {pipeline_mode = #tpu.pipeline_mode<synchronous>, transform_indices = @transform_9, window_bounds = array<i64: 1, 784>}, {transform_indices = @transform_10, window_bounds = array<i64: 8, 784>}, {transform_indices = @transform_11, window_bounds = array<i64: 8, 20>}]} {
    %c0 = arith.constant 0 : index
    %c0_0 = arith.constant 0 : index
    %0 = vector.load %arg1[%c0, %c0_0] : memref<8x784xf32, #tpu.memory_space<vmem>>, vector<8x784xf32>
    %1 = arith.truncf %0 : vector<8x784xf32> to vector<8x784xbf16>
    %c0_1 = arith.constant 0 : index
    %c0_2 = arith.constant 0 : index
    %2 = vector.load %arg3[%c0_1, %c0_2] : memref<784x128xbf16, #tpu.memory_space<vmem>>, vector<784x128xbf16>
    %cst = arith.constant dense<0.000000e+00> : vector<8x128xf32>
    %3 = tpu.matmul %1, %2, %cst {dimension_numbers = #tpu.dot_dimension_numbers<[1], [0], [0], [1], [0, 0, 1, 1], [], []>} : vector<8x784xbf16>, vector<784x128xbf16>, vector<8x128xf32> -> vector<8x128xf32>
    %c0_3 = arith.constant 0 : index
    %c0_4 = arith.constant 0 : index
    %4 = vector.load %arg4[%c0_3, %c0_4] : memref<1x128xf32, #tpu.memory_space<vmem>>, vector<1x128xf32>
    %5 = vector.broadcast %4 : vector<1x128xf32> to vector<8x128xf32>
    %6 = arith.addf %3, %5 : vector<8x128xf32>
    %cst_5 = arith.constant 0.000000e+00 : f32
    %7 = vector.broadcast %cst_5 : f32 to vector<8x128xf32>
    %8 = arith.maximumf %6, %7 : vector<8x128xf32>
    %c0_6 = arith.constant 0 : index
    %c0_7 = arith.constant 0 : index
    %9 = vector.load %arg5[%c0_6, %c0_7] : memref<128x20xf32, #tpu.memory_space<vmem>>, vector<128x20xf32>
    %cst_8 = arith.constant dense<0.000000e+00> : vector<8x20xf32>
    %10 = tpu.matmul %8, %9, %cst_8 {dimension_numbers = #tpu.dot_dimension_numbers<[1], [0], [0], [1], [0, 0, 1, 1], [], []>} : vector<8x128xf32>, vector<128x20xf32>, vector<8x20xf32> -> vector<8x20xf32>
    %c0_9 = arith.constant 0 : index
    %c0_10 = arith.constant 0 : index
    %11 = vector.load %arg6[%c0_9, %c0_10] : memref<1x20xf32, #tpu.memory_space<vmem>>, vector<1x20xf32>
    %12 = vector.broadcast %11 : vector<1x20xf32> to vector<8x20xf32>
    %13 = arith.addf %10, %12 : vector<8x20xf32>
    %14 = vector.extract_strided_slice %13 {offsets = [0, 0], sizes = [8, 10], strides = [1, 1]} : vector<8x20xf32> to vector<8x10xf32>
    %15 = vector.extract_strided_slice %13 {offsets = [0, 10], sizes = [8, 10], strides = [1, 1]} : vector<8x20xf32> to vector<8x10xf32>
    %cst_11 = arith.constant 5.000000e-01 : f32
    %16 = vector.broadcast %cst_11 : f32 to vector<8x10xf32>
    %17 = arith.mulf %16, %15 : vector<8x10xf32>
    %18 = math.exp %17 : vector<8x10xf32>
    %c0_12 = arith.constant 0 : index
    %c0_13 = arith.constant 0 : index
    %19 = vector.load %arg2[%c0_12, %c0_13] : memref<8x10xf32, #tpu.memory_space<vmem>>, vector<8x10xf32>
    %20 = arith.mulf %19, %18 : vector<8x10xf32>
    %21 = arith.addf %14, %20 : vector<8x10xf32>
    %c0_14 = arith.constant 0 : index
    %c0_15 = arith.constant 0 : index
    %22 = vector.load %arg7[%c0_14, %c0_15] : memref<10x128xf32, #tpu.memory_space<vmem>>, vector<10x128xf32>
    %cst_16 = arith.constant dense<0.000000e+00> : vector<8x128xf32>
    %23 = tpu.matmul %21, %22, %cst_16 {dimension_numbers = #tpu.dot_dimension_numbers<[1], [0], [0], [1], [0, 0, 1, 1], [], []>} : vector<8x10xf32>, vector<10x128xf32>, vector<8x128xf32> -> vector<8x128xf32>
    %c0_17 = arith.constant 0 : index
    %c0_18 = arith.constant 0 : index
    %24 = vector.load %arg8[%c0_17, %c0_18] : memref<1x128xf32, #tpu.memory_space<vmem>>, vector<1x128xf32>
    %25 = vector.broadcast %24 : vector<1x128xf32> to vector<8x128xf32>
    %26 = arith.addf %23, %25 : vector<8x128xf32>
    %cst_19 = arith.constant 0.000000e+00 : f32
    %27 = vector.broadcast %cst_19 : f32 to vector<8x128xf32>
    %28 = arith.maximumf %26, %27 : vector<8x128xf32>
    %29 = arith.truncf %28 : vector<8x128xf32> to vector<8x128xbf16>
    %c0_20 = arith.constant 0 : index
    %c0_21 = arith.constant 0 : index
    %30 = vector.load %arg9[%c0_20, %c0_21] : memref<128x784xbf16, #tpu.memory_space<vmem>>, vector<128x784xbf16>
    %cst_22 = arith.constant dense<0.000000e+00> : vector<8x784xf32>
    %31 = tpu.matmul %29, %30, %cst_22 {dimension_numbers = #tpu.dot_dimension_numbers<[1], [0], [0], [1], [0, 0, 1, 1], [], []>} : vector<8x128xbf16>, vector<128x784xbf16>, vector<8x784xf32> -> vector<8x784xf32>
    %c0_23 = arith.constant 0 : index
    %c0_24 = arith.constant 0 : index
    %32 = vector.load %arg10[%c0_23, %c0_24] : memref<1x784xf32, #tpu.memory_space<vmem>>, vector<1x784xf32>
    %33 = vector.broadcast %32 : vector<1x784xf32> to vector<8x784xf32>
    %34 = arith.addf %31, %33 : vector<8x784xf32>
    %35 = arith.negf %34 : vector<8x784xf32>
    %36 = math.exp %35 : vector<8x784xf32>
    %cst_25 = arith.constant 1.000000e+00 : f32
    %37 = vector.broadcast %cst_25 : f32 to vector<8x784xf32>
    %38 = arith.addf %37, %36 : vector<8x784xf32>
    %39 = arith.divf %37, %38 : vector<8x784xf32>
    %40 = arith.truncf %39 : vector<8x784xf32> to vector<8x784xbf16>
    %c0_26 = arith.constant 0 : index
    %c0_27 = arith.constant 0 : index
    %41 = vector.load %arg11[%c0_26, %c0_27] : memref<8x784xbf16, #tpu.memory_space<vmem>>, vector<8x784xbf16>
    tpu.vector_store %arg11[%c0_26, %c0_27], %40 {strides = array<i32>} : memref<8x784xbf16, #tpu.memory_space<vmem>>, vector<8x784xbf16>,
    %c0_28 = arith.constant 0 : index
    %c0_29 = arith.constant 0 : index
    %42 = vector.load %arg12[%c0_28, %c0_29] : memref<8x20xf32, #tpu.memory_space<vmem>>, vector<8x20xf32>
    tpu.vector_store %arg12[%c0_28, %c0_29], %13 {strides = array<i32>} : memref<8x20xf32, #tpu.memory_space<vmem>>, vector<8x20xf32>,
    return
  }
  func.func @transform_0(%arg0: i32) -> (i32, i32) {
    %c0_i32 = arith.constant 0 : i32
    %c0_i32_0 = arith.constant 0 : i32
    return %arg0, %c0_i32 : i32, i32
  }
  func.func @transform_1(%arg0: i32) -> (i32, i32) {
    %c0_i32 = arith.constant 0 : i32
    %c0_i32_0 = arith.constant 0 : i32
    return %arg0, %c0_i32 : i32, i32
  }
  func.func @transform_2(%arg0: i32) -> (i32, i32) {
    %c0_i32 = arith.constant 0 : i32
    %c0_i32_0 = arith.constant 0 : i32
    %c0_i32_1 = arith.constant 0 : i32
    return %c0_i32, %c0_i32_0 : i32, i32
  }
  func.func @transform_3(%arg0: i32) -> (i32, i32) {
    %c0_i32 = arith.constant 0 : i32
    %c0_i32_0 = arith.constant 0 : i32
    %c0_i32_1 = arith.constant 0 : i32
    return %c0_i32, %c0_i32_0 : i32, i32
  }
  func.func @transform_4(%arg0: i32) -> (i32, i32) {
    %c0_i32 = arith.constant 0 : i32
    %c0_i32_0 = arith.constant 0 : i32
    %c0_i32_1 = arith.constant 0 : i32
    return %c0_i32, %c0_i32_0 : i32, i32
  }
  func.func @transform_5(%arg0: i32) -> (i32, i32) {
    %c0_i32 = arith.constant 0 : i32
    %c0_i32_0 = arith.constant 0 : i32
    %c0_i32_1 = arith.constant 0 : i32
    return %c0_i32, %c0_i32_0 : i32, i32
  }
  func.func @transform_6(%arg0: i32) -> (i32, i32) {
    %c0_i32 = arith.constant 0 : i32
    %c0_i32_0 = arith.constant 0 : i32
    %c0_i32_1 = arith.constant 0 : i32
    return %c0_i32, %c0_i32_0 : i32, i32
  }
  func.func @transform_7(%arg0: i32) -> (i32, i32) {
    %c0_i32 = arith.constant 0 : i32
    %c0_i32_0 = arith.constant 0 : i32
    %c0_i32_1 = arith.constant 0 : i32
    return %c0_i32, %c0_i32_0 : i32, i32
  }
  func.func @transform_8(%arg0: i32) -> (i32, i32) {
    %c0_i32 = arith.constant 0 : i32
    %c0_i32_0 = arith.constant 0 : i32
    %c0_i32_1 = arith.constant 0 : i32
    return %c0_i32, %c0_i32_0 : i32, i32
  }
  func.func @transform_9(%arg0: i32) -> (i32, i32) {
    %c0_i32 = arith.constant 0 : i32
    %c0_i32_0 = arith.constant 0 : i32
    %c0_i32_1 = arith.constant 0 : i32
    return %c0_i32, %c0_i32_0 : i32, i32
  }
  func.func @transform_10(%arg0: i32) -> (i32, i32) {
    %c0_i32 = arith.constant 0 : i32
    %c0_i32_0 = arith.constant 0 : i32
    return %arg0, %c0_i32 : i32, i32
  }
  func.func @transform_11(%arg0: i32) -> (i32, i32) {
    %c0_i32 = arith.constant 0 : i32
    %c0_i32_0 = arith.constant 0 : i32
    return %arg0, %c0_i32 : i32, i32
  }
}

</mosaic_0001>

<llo_original>
// kernel: vae_forward.1
$region0: #{vae_forward.1}
  #allocation0 [shape = 'u32[]', space=smem, size = 0x4, offset = 0x4, fixed_abs, tag = 'smem constant byte address 0x4 - core index']
  #allocation1 [shape = 'u32[144,128]{1,0:T(1,128)}', space=vmem, size = 0x12000, scoped, tag = 'internal scratch']
  %s0 = inlined_call_operand.vmem [shape: f32[16,784], index: 0, kind: input, shape index: {}]
  %s1 = inlined_call_operand.vmem [shape: f32[16,10], index: 1, kind: input, shape index: {}]
  %s2 = inlined_call_operand.vmem [shape: bf16[784,128], index: 2, kind: input, shape index: {}]
  %s3 = inlined_call_operand.vmem [shape: f32[1,128], index: 3, kind: input, shape index: {}]
  %s4 = inlined_call_operand.vmem [shape: f32[128,20], index: 4, kind: input, shape index: {}]
  %s5 = inlined_call_operand.vmem [shape: f32[1,20], index: 5, kind: input, shape index: {}]
  %s6 = inlined_call_operand.vmem [shape: f32[10,128], index: 6, kind: input, shape index: {}]
  %s7 = inlined_call_operand.vmem [shape: f32[1,128], index: 7, kind: input, shape index: {}]
  %s8 = inlined_call_operand.vmem [shape: bf16[128,784], index: 8, kind: input, shape index: {}]
  %s9 = inlined_call_operand.vmem [shape: f32[1,784], index: 9, kind: input, shape index: {}]
  %s10 = inlined_call_operand.hbm [shape: bf16[16,784], index: 10, kind: output, shape index: {0}]
  %s11 = inlined_call_operand.vmem [shape: f32[16,20], index: 11, kind: output, shape index: {1}]
  %12 = xla_tuple %s10, %s11
  %s13 = sld [smem:[#allocation0]]
  $region81: #{vae_forward.1} parent=0
    _
  %s15 = ssub.s32 1, %s13
  %s16 = scalar_select 0, %s15, %s13
  $region1: #{vae_forward.1} parent=0
    #allocation2 [shape = 'u8[28672]{0}', space=vmem, size = 0x7000, scoped, tag = 'output window, operand 0']
    #allocation3 [shape = 's32[2]{0}', space=sflag, size = 0x8, scoped, tag = 'scoped memory for vae_forward.1']
    %17 = vsyncpa [#allocation3], 0
    %s18 = scalar_lea.sflag [#allocation3], 1
    %19 = vsyncpa %s18, 0
    loop: start=0, step=1, limit=4
    $region2: #{vae_forward.1} parent=1 // loop_pre_header
      _
    $region3: #{vae_forward.1} parent=1 // loop_header
      %s21 = sphi 0, %s25
      %p22 = scmp.ge.s32.totalorder %s21, 4
      %s31 = sphi 0, %s33
      %s34 = sphi 0, %s31
      %s35 = sphi 0, %s34
      %s51 = sphi 0, %s35
      %s57 = sphi 0, %s59
      %s60 = sphi 0, %s57
      %s61 = sphi 0, %s60
      %s77 = sphi 0, %s61
      %s81 = sphi 0, %s81
      %s83 = sphi 0, %s81
      %s84 = sphi 0, %s83
      %s98 = sphi 0, %s84
      %s102 = sphi 0, %s102
      %s104 = sphi 0, %s102
      %s105 = sphi 0, %s104
      %s119 = sphi 0, %s105
      %s123 = sphi 0, %s123
      %s125 = sphi 0, %s123
      %s126 = sphi 0, %s125
      %s140 = sphi 0, %s126
      %s144 = sphi 0, %s144
      %s146 = sphi 0, %s144
      %s147 = sphi 0, %s146
      %s161 = sphi 0, %s147
      %s165 = sphi 0, %s165
      %s167 = sphi 0, %s165
      %s168 = sphi 0, %s167
      %s182 = sphi 0, %s168
      %s186 = sphi 0, %s186
      %s188 = sphi 0, %s186
      %s189 = sphi 0, %s188
      %s203 = sphi 0, %s189
      %s207 = sphi 0, %s207
      %s209 = sphi 0, %s207
      %s210 = sphi 0, %s209
      %s224 = sphi 0, %s210
      %s228 = sphi 0, %s228
      %s230 = sphi 0, %s228
      %s231 = sphi 0, %s230
      %s245 = sphi 0, %s231
      %s251 = sphi 0, %s253
      %s254 = sphi 0, %s251
      %s255 = sphi 0, %s254
      %s271 = sphi 0, %s255
      %s277 = sphi 0, %s279
      %s280 = sphi 0, %s277
      %s281 = sphi 0, %s280
      %s297 = sphi 0, %s281
    $region4: #{vae_forward.1} parent=1 // loop_header_branch
      %24 = sbr.rel (%p22) target = $region8
    $region5: #{vae_forward.1} parent=1 // loop_body
      %s26 = ssub.s32 %s21, 1
      %s27 = ssub.s32 %s21, 2
      %s28 = sadd.s32 %s21, 1
      %s29 = ssub.s32 %s21, %s28
      %p30 = scmp.eq.s32.totalorder %s29, 0
      %s32 = sadd.s32 %s31, 1
      %s33 = scalar_select %p30, %s31, %s32
      %p36 = pneg %p30
      %p37 = scmp.eq.s32.totalorder %s21, 1
      %p38 = por %p36, %p37
      %p39 = scmp.ne.s32.totalorder %s31, %s34
      %p40 = scmp.eq.s32.totalorder %s21, 0
      %p41 = por %p39, %p40
      %p42 = scmp.ne.s32.totalorder %s31, %s34
      %p43 = scmp.eq.s32.totalorder %s26, 1
      %p44 = por %p42, %p43
      %p45 = scmp.ne.s32.totalorder %s34, %s35
      %p46 = scmp.eq.s32.totalorder %s26, 0
      %p47 = por %p45, %p46
      %p48 = scmp.ne.s32.totalorder %s34, %s35
      %p49 = scmp.eq.s32.totalorder %s27, 1
      %p50 = por %p48, %p49
      %p52 = scmp.ne.s32.totalorder %s35, %s51
      %p53 = scmp.eq.s32.totalorder %s27, 0
      %p54 = por %p52, %p53
      %s55 = ssub.s32 %s21, %s28
      %p56 = scmp.eq.s32.totalorder %s55, 0
      %s58 = sadd.s32 %s57, 1
      %s59 = scalar_select %p56, %s57, %s58
      %p62 = pneg %p56
      %p63 = scmp.eq.s32.totalorder %s21, 1
      %p64 = por %p62, %p63
      %p65 = scmp.ne.s32.totalorder %s57, %s60
      %p66 = scmp.eq.s32.totalorder %s21, 0
      %p67 = por %p65, %p66
      %p68 = scmp.ne.s32.totalorder %s57, %s60
      %p69 = scmp.eq.s32.totalorder %s26, 1
      %p70 = por %p68, %p69
      %p71 = scmp.ne.s32.totalorder %s60, %s61
      %p72 = scmp.eq.s32.totalorder %s26, 0
      %p73 = por %p71, %p72
      %p74 = scmp.ne.s32.totalorder %s60, %s61
      %p75 = scmp.eq.s32.totalorder %s27, 1
      %p76 = por %p74, %p75
      %p78 = scmp.ne.s32.totalorder %s61, %s77
      %p79 = scmp.eq.s32.totalorder %s27, 0
      %p80 = por %p78, %p79
      %s82 = sadd.s32 %s81, 1
      %p85 = scmp.eq.s32.totalorder %s21, 1
      %p86 = scmp.ne.s32.totalorder %s81, %s83
      %p87 = scmp.eq.s32.totalorder %s21, 0
      %p88 = por %p86, %p87
      %p89 = scmp.ne.s32.totalorder %s81, %s83
      %p90 = scmp.eq.s32.totalorder %s26, 1
      %p91 = por %p89, %p90
      %p92 = scmp.ne.s32.totalorder %s83, %s84
      %p93 = scmp.eq.s32.totalorder %s26, 0
      %p94 = por %p92, %p93
      %p95 = scmp.ne.s32.totalorder %s83, %s84
      %p96 = scmp.eq.s32.totalorder %s27, 1
      %p97 = por %p95, %p96
      %p99 = scmp.ne.s32.totalorder %s84, %s98
      %p100 = scmp.eq.s32.totalorder %s27, 0
      %p101 = por %p99, %p100
      %s103 = sadd.s32 %s102, 1
      %p106 = scmp.eq.s32.totalorder %s21, 1
      %p107 = scmp.ne.s32.totalorder %s102, %s104
      %p108 = scmp.eq.s32.totalorder %s21, 0
      %p109 = por %p107, %p108
      %p110 = scmp.ne.s32.totalorder %s102, %s104
      %p111 = scmp.eq.s32.totalorder %s26, 1
      %p112 = por %p110, %p111
      %p113 = scmp.ne.s32.totalorder %s104, %s105
      %p114 = scmp.eq.s32.totalorder %s26, 0
      %p115 = por %p113, %p114
      %p116 = scmp.ne.s32.totalorder %s104, %s105
      %p117 = scmp.eq.s32.totalorder %s27, 1
      %p118 = por %p116, %p117
      %p120 = scmp.ne.s32.totalorder %s105, %s119
      %p121 = scmp.eq.s32.totalorder %s27, 0
      %p122 = por %p120, %p121
      %s124 = sadd.s32 %s123, 1
      %p127 = scmp.eq.s32.totalorder %s21, 1
      %p128 = scmp.ne.s32.totalorder %s123, %s125
      %p129 = scmp.eq.s32.totalorder %s21, 0
      %p130 = por %p128, %p129
      %p131 = scmp.ne.s32.totalorder %s123, %s125
      %p132 = scmp.eq.s32.totalorder %s26, 1
      %p133 = por %p131, %p132
      %p134 = scmp.ne.s32.totalorder %s125, %s126
      %p135 = scmp.eq.s32.totalorder %s26, 0
      %p136 = por %p134, %p135
      %p137 = scmp.ne.s32.totalorder %s125, %s126
      %p138 = scmp.eq.s32.totalorder %s27, 1
      %p139 = por %p137, %p138
      %p141 = scmp.ne.s32.totalorder %s126, %s140
      %p142 = scmp.eq.s32.totalorder %s27, 0
      %p143 = por %p141, %p142
      %s145 = sadd.s32 %s144, 1
      %p148 = scmp.eq.s32.totalorder %s21, 1
      %p149 = scmp.ne.s32.totalorder %s144, %s146
      %p150 = scmp.eq.s32.totalorder %s21, 0
      %p151 = por %p149, %p150
      %p152 = scmp.ne.s32.totalorder %s144, %s146
      %p153 = scmp.eq.s32.totalorder %s26, 1
      %p154 = por %p152, %p153
      %p155 = scmp.ne.s32.totalorder %s146, %s147
      %p156 = scmp.eq.s32.totalorder %s26, 0
      %p157 = por %p155, %p156
      %p158 = scmp.ne.s32.totalorder %s146, %s147
      %p159 = scmp.eq.s32.totalorder %s27, 1
      %p160 = por %p158, %p159
      %p162 = scmp.ne.s32.totalorder %s147, %s161
      %p163 = scmp.eq.s32.totalorder %s27, 0
      %p164 = por %p162, %p163
      %s166 = sadd.s32 %s165, 1
      %p169 = scmp.eq.s32.totalorder %s21, 1
      %p170 = scmp.ne.s32.totalorder %s165, %s167
      %p171 = scmp.eq.s32.totalorder %s21, 0
      %p172 = por %p170, %p171
      %p173 = scmp.ne.s32.totalorder %s165, %s167
      %p174 = scmp.eq.s32.totalorder %s26, 1
      %p175 = por %p173, %p174
      %p176 = scmp.ne.s32.totalorder %s167, %s168
      %p177 = scmp.eq.s32.totalorder %s26, 0
      %p178 = por %p176, %p177
      %p179 = scmp.ne.s32.totalorder %s167, %s168
      %p180 = scmp.eq.s32.totalorder %s27, 1
      %p181 = por %p179, %p180
      %p183 = scmp.ne.s32.totalorder %s168, %s182
      %p184 = scmp.eq.s32.totalorder %s27, 0
      %p185 = por %p183, %p184
      %s187 = sadd.s32 %s186, 1
      %p190 = scmp.eq.s32.totalorder %s21, 1
      %p191 = scmp.ne.s32.totalorder %s186, %s188
      %p192 = scmp.eq.s32.totalorder %s21, 0
      %p193 = por %p191, %p192
      %p194 = scmp.ne.s32.totalorder %s186, %s188
      %p195 = scmp.eq.s32.totalorder %s26, 1
      %p196 = por %p194, %p195
      %p197 = scmp.ne.s32.totalorder %s188, %s189
      %p198 = scmp.eq.s32.totalorder %s26, 0
      %p199 = por %p197, %p198
      %p200 = scmp.ne.s32.totalorder %s188, %s189
      %p201 = scmp.eq.s32.totalorder %s27, 1
      %p202 = por %p200, %p201
      %p204 = scmp.ne.s32.totalorder %s189, %s203
      %p205 = scmp.eq.s32.totalorder %s27, 0
      %p206 = por %p204, %p205
      %s208 = sadd.s32 %s207, 1
      %p211 = scmp.eq.s32.totalorder %s21, 1
      %p212 = scmp.ne.s32.totalorder %s207, %s209
      %p213 = scmp.eq.s32.totalorder %s21, 0
      %p214 = por %p212, %p213
      %p215 = scmp.ne.s32.totalorder %s207, %s209
      %p216 = scmp.eq.s32.totalorder %s26, 1
      %p217 = por %p215, %p216
      %p218 = scmp.ne.s32.totalorder %s209, %s210
      %p219 = scmp.eq.s32.totalorder %s26, 0
      %p220 = por %p218, %p219
      %p221 = scmp.ne.s32.totalorder %s209, %s210
      %p222 = scmp.eq.s32.totalorder %s27, 1
      %p223 = por %p221, %p222
      %p225 = scmp.ne.s32.totalorder %s210, %s224
      %p226 = scmp.eq.s32.totalorder %s27, 0
      %p227 = por %p225, %p226
      %s229 = sadd.s32 %s228, 1
      %p232 = scmp.eq.s32.totalorder %s21, 1
      %p233 = scmp.ne.s32.totalorder %s228, %s230
      %p234 = scmp.eq.s32.totalorder %s21, 0
      %p235 = por %p233, %p234
      %p236 = scmp.ne.s32.totalorder %s228, %s230
      %p237 = scmp.eq.s32.totalorder %s26, 1
      %p238 = por %p236, %p237
      %p239 = scmp.ne.s32.totalorder %s230, %s231
      %p240 = scmp.eq.s32.totalorder %s26, 0
      %p241 = por %p239, %p240
      %p242 = scmp.ne.s32.totalorder %s230, %s231
      %p243 = scmp.eq.s32.totalorder %s27, 1
      %p244 = por %p242, %p243
      %p246 = scmp.ne.s32.totalorder %s231, %s245
      %p247 = scmp.eq.s32.totalorder %s27, 0
      %p248 = por %p246, %p247
      %s249 = ssub.s32 %s21, %s28
      %p250 = scmp.eq.s32.totalorder %s249, 0
      %s252 = sadd.s32 %s251, 1
      %s253 = scalar_select %p250, %s251, %s252
      %p256 = pneg %p250
      %p257 = scmp.eq.s32.totalorder %s21, 1
      %p258 = por %p256, %p257
      %p259 = scmp.ne.s32.totalorder %s251, %s254
      %p260 = scmp.eq.s32.totalorder %s21, 0
      %p261 = por %p259, %p260
      %p262 = scmp.ne.s32.totalorder %s251, %s254
      %p263 = scmp.eq.s32.totalorder %s26, 1
      %p264 = por %p262, %p263
      %p265 = scmp.ne.s32.totalorder %s254, %s255
      %p266 = scmp.eq.s32.totalorder %s26, 0
      %p267 = por %p265, %p266
      %p268 = scmp.ne.s32.totalorder %s254, %s255
      %p269 = scmp.eq.s32.totalorder %s27, 1
      %p270 = por %p268, %p269
      %p272 = scmp.ne.s32.totalorder %s255, %s271
      %p273 = scmp.eq.s32.totalorder %s27, 0
      %p274 = por %p272, %p273
      %s275 = ssub.s32 %s21, %s28
      %p276 = scmp.eq.s32.totalorder %s275, 0
      %s278 = sadd.s32 %s277, 1
      %s279 = scalar_select %p276, %s277, %s278
      %p282 = pneg %p276
      %p283 = scmp.eq.s32.totalorder %s21, 1
      %p284 = por %p282, %p283
      %p285 = scmp.ne.s32.totalorder %s277, %s280
      %p286 = scmp.eq.s32.totalorder %s21, 0
      %p287 = por %p285, %p286
      %p288 = scmp.ne.s32.totalorder %s277, %s280
      %p289 = scmp.eq.s32.totalorder %s26, 1
      %p290 = por %p288, %p289
      %p291 = scmp.ne.s32.totalorder %s280, %s281
      %p292 = scmp.eq.s32.totalorder %s26, 0
      %p293 = por %p291, %p292
      %p294 = scmp.ne.s32.totalorder %s280, %s281
      %p295 = scmp.eq.s32.totalorder %s27, 1
      %p296 = por %p294, %p295
      %p298 = scmp.ne.s32.totalorder %s281, %s297
      %p299 = scmp.eq.s32.totalorder %s27, 0
      %p300 = por %p298, %p299
      %p301 = scmp.le.s32.totalorder 1, %s21
      %p302 = scmp.lt.s32.totalorder %s21, 3
      %p303 = pnand %p301, %p302
      %p304 = pneg %p303
      // Predicated region
      $region9: #{vae_forward.1} parent=5 // pred_check
        _
      $region10: #{vae_forward.1} parent=5 // pred_check_branch
        %306 = sbr.rel (%p303) target = $region12
      $region11: #{vae_forward.1} parent=5 // pred_region
        %s307 = ssub.s32 %s21, 1
        // Predicated region
        $region13: #{vae_forward.1} parent=11 // pred_check
          %p308 = pneg %p94
        $region14: #{vae_forward.1} parent=11 // pred_check_branch
          %310 = sbr.rel (%p308) target = $region16
        $region15: #{vae_forward.1} parent=11 // pred_region
          _
        $region16: #{vae_forward.1} parent=11 // pred_fallthru
          _
        // Predicated region
        $region17: #{vae_forward.1} parent=11 // pred_check
          %p311 = pneg %p115
        $region18: #{vae_forward.1} parent=11 // pred_check_branch
          %313 = sbr.rel (%p311) target = $region20
        $region19: #{vae_forward.1} parent=11 // pred_region
          _
        $region20: #{vae_forward.1} parent=11 // pred_fallthru
          _
        // Predicated region
        $region21: #{vae_forward.1} parent=11 // pred_check
          %p314 = pneg %p136
        $region22: #{vae_forward.1} parent=11 // pred_check_branch
          %316 = sbr.rel (%p314) target = $region24
        $region23: #{vae_forward.1} parent=11 // pred_region
          _
        $region24: #{vae_forward.1} parent=11 // pred_fallthru
          _
        // Predicated region
        $region25: #{vae_forward.1} parent=11 // pred_check
          %p317 = pneg %p157
        $region26: #{vae_forward.1} parent=11 // pred_check_branch
          %319 = sbr.rel (%p317) target = $region28
        $region27: #{vae_forward.1} parent=11 // pred_region
          _
        $region28: #{vae_forward.1} parent=11 // pred_fallthru
          _
        // Predicated region
        $region29: #{vae_forward.1} parent=11 // pred_check
          %p320 = pneg %p178
        $region30: #{vae_forward.1} parent=11 // pred_check_branch
          %322 = sbr.rel (%p320) target = $region32
        $region31: #{vae_forward.1} parent=11 // pred_region
          _
        $region32: #{vae_forward.1} parent=11 // pred_fallthru
          _
        // Predicated region
        $region33: #{vae_forward.1} parent=11 // pred_check
          %p323 = pneg %p199
        $region34: #{vae_forward.1} parent=11 // pred_check_branch
          %325 = sbr.rel (%p323) target = $region36
        $region35: #{vae_forward.1} parent=11 // pred_region
          _
        $region36: #{vae_forward.1} parent=11 // pred_fallthru
          _
        // Predicated region
        $region37: #{vae_forward.1} parent=11 // pred_check
          %p326 = pneg %p220
        $region38: #{vae_forward.1} parent=11 // pred_check_branch
          %328 = sbr.rel (%p326) target = $region40
        $region39: #{vae_forward.1} parent=11 // pred_region
          _
        $region40: #{vae_forward.1} parent=11 // pred_fallthru
          _
        // Predicated region
        $region41: #{vae_forward.1} parent=11 // pred_check
          %p329 = pneg %p241
        $region42: #{vae_forward.1} parent=11 // pred_check_branch
          %331 = sbr.rel (%p329) target = $region44
        $region43: #{vae_forward.1} parent=11 // pred_region
          _
        $region44: #{vae_forward.1} parent=11 // pred_fallthru
          _
      $region12: #{vae_forward.1} parent=5 // pred_fallthru
        _
      %p332 = scmp.lt.s32.totalorder %s21, 2
      // Predicated region
      $region45: #{vae_forward.1} parent=5 // pred_check
        %p333 = pneg %p332
      $region46: #{vae_forward.1} parent=5 // pred_check_branch
        %335 = sbr.rel (%p333) target = $region48
      $region47: #{vae_forward.1} parent=5 // pred_region
        // Predicated region
        $region49: #{vae_forward.1} parent=47 // pred_check
          %p336 = pneg %p41
        $region50: #{vae_forward.1} parent=47 // pred_check_branch
          %338 = sbr.rel (%p336) target = $region52
        $region51: #{vae_forward.1} parent=47 // pred_region
          %p339 = scmp.lt.s32.totalorder %s21, 1
          %s340 = scalar_select %p339, %s21, 1
          %s341 = smul.addr %s340, 7
          %s342 = smul.addr %s341, 8
          %s343 = scalar_lea.vmem %s0, %s342
        $region52: #{vae_forward.1} parent=47 // pred_fallthru
          _
        // Predicated region
        $region53: #{vae_forward.1} parent=47 // pred_check
          %p344 = pneg %p67
        $region54: #{vae_forward.1} parent=47 // pred_check_branch
          %346 = sbr.rel (%p344) target = $region56
        $region55: #{vae_forward.1} parent=47 // pred_region
          %p347 = scmp.lt.s32.totalorder %s21, 1
          %s348 = scalar_select %p347, %s21, 1
          %s349 = smul.addr %s348, 8
          %s350 = scalar_lea.vmem %s1, %s349
        $region56: #{vae_forward.1} parent=47 // pred_fallthru
          _
      $region48: #{vae_forward.1} parent=5 // pred_fallthru
        _
      %p351 = scmp.le.s32.totalorder 1, %s21
      %p352 = scmp.lt.s32.totalorder %s21, 3
      %p353 = pnand %p351, %p352
      %p354 = pneg %p353
      // Predicated region
      $region57: #{vae_forward.1} parent=5 // pred_check
        _
      $region58: #{vae_forward.1} parent=5 // pred_check_branch
        %356 = sbr.rel (%p353) target = $region60
      $region59: #{vae_forward.1} parent=5 // pred_region
        %s357 = ssub.s32 %s21, 1
        %p358 = scmp.lt.s32.totalorder %s26, 1
        %s359 = scalar_select %p358, %s26, 1
        %s360 = smul.addr %s359, 7
        %s361 = smul.addr %s360, 8
        %s362 = scalar_lea.vmem %s0, %s361
        %p363 = pneg %p47
        %p364 = pneg %p44
        %p365 = scmp.lt.s32.totalorder %s26, 1
        %s366 = scalar_select %p365, %s26, 1
        %s367 = smul.addr %s366, 8
        %s368 = scalar_lea.vmem %s1, %s367
        %p369 = pneg %p73
        %p370 = pneg %p70
        %p371 = pneg %p94
        %p372 = pneg %p91
        %p373 = pneg %p115
        %p374 = pneg %p112
        %p375 = pneg %p136
        %p376 = pneg %p133
        %p377 = pneg %p157
        %p378 = pneg %p154
        %p379 = pneg %p178
        %p380 = pneg %p175
        %p381 = pneg %p199
        %p382 = pneg %p196
        %p383 = pneg %p220
        %p384 = pneg %p217
        %p385 = pneg %p241
        %p386 = pneg %p238
        %p387 = pneg %p267
        %p388 = pneg %p264
        %s389 = sand.u32 %s254, 1
        %s390 = scalar_lea.sflag [#allocation3], %s389
        %s391 = sand.u32 %s254, 1
        %s392 = smul.addr %s391, 28
        %s393 = scalar_lea.vmem [#allocation2], %s392
        %p394 = pneg %p293
        %p395 = pneg %p290
        %p396 = scmp.lt.s32.totalorder %s26, 1
        %s397 = scalar_select %p396, %s26, 1
        %s398 = smul.addr %s397, 8
        %s399 = scalar_lea.vmem %s11, %s398
        %p400 = scmp.lt.s32.totalorder %s26, 1
        %s401 = scalar_select %p400, %s26, 1
        %s402 = smul.addr %s401, 7
        %s403 = smul.addr %s402, 8
        %s404 = scalar_lea.vmem %s0, %s403
        %p405 = scmp.lt.s32.totalorder %s26, 1
        %s406 = scalar_select %p405, %s26, 1
        %s407 = smul.addr %s406, 8
        %s408 = scalar_lea.vmem %s1, %s407
        %p409 = scmp.lt.s32.totalorder %s26, 1
        %s410 = scalar_select %p409, %s26, 1
        %s411 = smul.addr %s410, 8
        %s412 = scalar_lea.vmem %s11, %s411
        %v414 = vld [vmem:[%s404] sm:$0xff]
        %v415 = vld [vmem:[%s404 + $0x8] sm:$0xff]
        %v416 = vld [vmem:[%s404 + $0x10] sm:$0xff]
        %v417 = vld [vmem:[%s404 + $0x18] sm:$0xff]
        %v418 = vld [vmem:[%s404 + $0x20] sm:$0xff]
        %v419 = vld [vmem:[%s404 + $0x28] sm:$0xff]
        %v420 = vld [vmem:[%s404 + $0x30] sm:$0xff]
        %v421 = vpack.c.bf16 %v414, %v414
        %v422 = vpack.c.bf16 %v415, %v415
        %v423 = vpack.c.bf16 %v416, %v416
        %v424 = vpack.c.bf16 %v417, %v417
        %v425 = vpack.c.bf16 %v418, %v418
        %v426 = vpack.c.bf16 %v419, %v419
        %v427 = vpack.c.bf16 %v420, %v420
        %v428 = vld [vmem:[%s2] sm:$0xf]
        %v429 = vld [vmem:[%s2 + $0x4] sm:$0xf]
        %v430 = vld [vmem:[%s2 + $0x8] sm:$0xf]
        %v431 = vld [vmem:[%s2 + $0xc] sm:$0xf]
        %v432 = vld [vmem:[%s2 + $0x10] sm:$0xf]
        %v433 = vld [vmem:[%s2 + $0x14] sm:$0xf]
        %v434 = vld [vmem:[%s2 + $0x18] sm:$0xf]
        %v435 = vld [vmem:[%s2 + $0x1c] sm:$0xf]
        %v436 = vld [vmem:[%s2 + $0x20] sm:$0xf]
        %v437 = vld [vmem:[%s2 + $0x24] sm:$0xf]
        %v438 = vld [vmem:[%s2 + $0x28] sm:$0xf]
        %v439 = vld [vmem:[%s2 + $0x2c] sm:$0xf]
        %v440 = vld [vmem:[%s2 + $0x30] sm:$0xf]
        %v441 = vld [vmem:[%s2 + $0x34] sm:$0xf]
        %v442 = vld [vmem:[%s2 + $0x38] sm:$0xf]
        %v443 = vld [vmem:[%s2 + $0x3c] sm:$0xf]
        %v444 = vld [vmem:[%s2 + $0x40] sm:$0xf]
        %v445 = vld [vmem:[%s2 + $0x44] sm:$0xf]
        %v446 = vld [vmem:[%s2 + $0x48] sm:$0xf]
        %v447 = vld [vmem:[%s2 + $0x4c] sm:$0xf]
        %v448 = vld [vmem:[%s2 + $0x50] sm:$0xf]
        %v449 = vld [vmem:[%s2 + $0x54] sm:$0xf]
        %v450 = vld [vmem:[%s2 + $0x58] sm:$0xf]
        %v451 = vld [vmem:[%s2 + $0x5c] sm:$0xf]
        %v452 = vld [vmem:[%s2 + $0x60] sm:$0xf]
        %v453 = vld [vmem:[%s2 + $0x64] sm:$0xf]
        %v454 = vld [vmem:[%s2 + $0x68] sm:$0xf]
        %v455 = vld [vmem:[%s2 + $0x6c] sm:$0xf]
        %v456 = vld [vmem:[%s2 + $0x70] sm:$0xf]
        %v457 = vld [vmem:[%s2 + $0x74] sm:$0xf]
        %v458 = vld [vmem:[%s2 + $0x78] sm:$0xf]
        %v459 = vld [vmem:[%s2 + $0x7c] sm:$0xf]
        %v460 = vld [vmem:[%s2 + $0x80] sm:$0xf]
        %v461 = vld [vmem:[%s2 + $0x84] sm:$0xf]
        %v462 = vld [vmem:[%s2 + $0x88] sm:$0xf]
        %v463 = vld [vmem:[%s2 + $0x8c] sm:$0xf]
        %v464 = vld [vmem:[%s2 + $0x90] sm:$0xf]
        %v465 = vld [vmem:[%s2 + $0x94] sm:$0xf]
        %v466 = vld [vmem:[%s2 + $0x98] sm:$0xf]
        %v467 = vld [vmem:[%s2 + $0x9c] sm:$0xf]
        %v468 = vld [vmem:[%s2 + $0xa0] sm:$0xf]
        %v469 = vld [vmem:[%s2 + $0xa4] sm:$0xf]
        %v470 = vld [vmem:[%s2 + $0xa8] sm:$0xf]
        %v471 = vld [vmem:[%s2 + $0xac] sm:$0xf]
        %v472 = vld [vmem:[%s2 + $0xb0] sm:$0xf]
        %v473 = vld [vmem:[%s2 + $0xb4] sm:$0xf]
        %v474 = vld [vmem:[%s2 + $0xb8] sm:$0xf]
        %v475 = vld [vmem:[%s2 + $0xbc] sm:$0xf]
        %v476 = vld [vmem:[%s2 + $0xc0] sm:$0xf]
        %v477 = vld [vmem:[%s2 + $0xc4] sm:$0xf]
        %v478 = vld [vmem:[%s2 + $0xc8] sm:$0xf]
        %v479 = vld [vmem:[%s2 + $0xcc] sm:$0xf]
        %v480 = vld [vmem:[%s2 + $0xd0] sm:$0xf]
        %v481 = vld [vmem:[%s2 + $0xd4] sm:$0xf]
        %v482 = vld [vmem:[%s2 + $0xd8] sm:$0xf]
        %v483 = vld [vmem:[%s2 + $0xdc] sm:$0xf]
        %v484 = vld [vmem:[%s2 + $0xe0] sm:$0xf]
        %v485 = vld [vmem:[%s2 + $0xe4] sm:$0xf]
        %v486 = vld [vmem:[%s2 + $0xe8] sm:$0xf]
        %v487 = vld [vmem:[%s2 + $0xec] sm:$0xf]
        %v488 = vld [vmem:[%s2 + $0xf0] sm:$0xf]
        %v489 = vld [vmem:[%s2 + $0xf4] sm:$0xf]
        %v490 = vld [vmem:[%s2 + $0xf8] sm:$0xf]
        %v491 = vld [vmem:[%s2 + $0xfc] sm:$0xf]
        %v492 = vld [vmem:[%s2 + $0x100] sm:$0xf]
        %v493 = vld [vmem:[%s2 + $0x104] sm:$0xf]
        %v494 = vld [vmem:[%s2 + $0x108] sm:$0xf]
        %v495 = vld [vmem:[%s2 + $0x10c] sm:$0xf]
        %v496 = vld [vmem:[%s2 + $0x110] sm:$0xf]
        %v497 = vld [vmem:[%s2 + $0x114] sm:$0xf]
        %v498 = vld [vmem:[%s2 + $0x118] sm:$0xf]
        %v499 = vld [vmem:[%s2 + $0x11c] sm:$0xf]
        %v500 = vld [vmem:[%s2 + $0x120] sm:$0xf]
        %v501 = vld [vmem:[%s2 + $0x124] sm:$0xf]
        %v502 = vld [vmem:[%s2 + $0x128] sm:$0xf]
        %v503 = vld [vmem:[%s2 + $0x12c] sm:$0xf]
        %v504 = vld [vmem:[%s2 + $0x130] sm:$0xf]
        %v505 = vld [vmem:[%s2 + $0x134] sm:$0xf]
        %v506 = vld [vmem:[%s2 + $0x138] sm:$0xf]
        %v507 = vld [vmem:[%s2 + $0x13c] sm:$0xf]
        %v508 = vld [vmem:[%s2 + $0x140] sm:$0xf]
        %v509 = vld [vmem:[%s2 + $0x144] sm:$0xf]
        %v510 = vld [vmem:[%s2 + $0x148] sm:$0xf]
        %v511 = vld [vmem:[%s2 + $0x14c] sm:$0xf]
        %v512 = vld [vmem:[%s2 + $0x150] sm:$0xf]
        %v513 = vld [vmem:[%s2 + $0x154] sm:$0xf]
        %v514 = vld [vmem:[%s2 + $0x158] sm:$0xf]
        %v515 = vld [vmem:[%s2 + $0x15c] sm:$0xf]
        %v516 = vld [vmem:[%s2 + $0x160] sm:$0xf]
        %v517 = vld [vmem:[%s2 + $0x164] sm:$0xf]
        %v518 = vld [vmem:[%s2 + $0x168] sm:$0xf]
        %v519 = vld [vmem:[%s2 + $0x16c] sm:$0xf]
        %v520 = vld [vmem:[%s2 + $0x170] sm:$0xf]
        %v521 = vld [vmem:[%s2 + $0x174] sm:$0xf]
        %v522 = vld [vmem:[%s2 + $0x178] sm:$0xf]
        %v523 = vld [vmem:[%s2 + $0x17c] sm:$0xf]
        %v524 = vld [vmem:[%s2 + $0x180] sm:$0xf]
        %v525 = vld [vmem:[%s2 + $0x184] sm:$0xf]
        %v526 = vld [vmem:[%s3] sm:$0x1]
        %v528 = vlaneseq
        %v529 = vshrl.u32 %v528, 7
        %v530 = vsub.s32 0, %v529
        %v531 = vrot.slane %v526, %v530
        %v631 = vunpack.c.l.b16 %v428
        %v632 = vunpack.c.l.b16 %v429
        %v633 = vunpack.c.l.b16 %v430
        %v634 = vunpack.c.l.b16 %v431
        %v635 = vunpack.c.l.b16 %v432
        %v636 = vunpack.c.l.b16 %v433
        %v637 = vunpack.c.l.b16 %v434
        %v638 = vunpack.c.l.b16 %v435
        %v639 = vunpack.c.l.b16 %v436
        %v640 = vunpack.c.l.b16 %v437
        %v641 = vunpack.c.l.b16 %v438
        %v642 = vunpack.c.l.b16 %v439
        %v643 = vunpack.c.l.b16 %v440
        %v644 = vunpack.c.l.b16 %v441
        %v645 = vunpack.c.l.b16 %v442
        %v646 = vunpack.c.l.b16 %v443
        %v647 = vunpack.c.l.b16 %v444
        %v648 = vunpack.c.l.b16 %v445
        %v649 = vunpack.c.l.b16 %v446
        %v650 = vunpack.c.l.b16 %v447
        %v651 = vunpack.c.l.b16 %v448
        %v652 = vunpack.c.l.b16 %v449
        %v653 = vunpack.c.l.b16 %v450
        %v654 = vunpack.c.l.b16 %v451
        %v655 = vunpack.c.l.b16 %v452
        %v656 = vunpack.c.l.b16 %v453
        %v657 = vunpack.c.l.b16 %v454
        %v658 = vunpack.c.l.b16 %v455
        %v659 = vunpack.c.l.b16 %v456
        %v660 = vunpack.c.l.b16 %v457
        %v661 = vunpack.c.l.b16 %v458
        %v662 = vunpack.c.l.b16 %v459
        %v663 = vunpack.c.l.b16 %v460
        %v664 = vunpack.c.l.b16 %v461
        %v665 = vunpack.c.l.b16 %v462
        %v666 = vunpack.c.l.b16 %v463
        %v667 = vunpack.c.l.b16 %v464
        %v668 = vunpack.c.l.b16 %v465
        %v669 = vunpack.c.l.b16 %v466
        %v670 = vunpack.c.l.b16 %v467
        %v671 = vunpack.c.l.b16 %v468
        %v672 = vunpack.c.l.b16 %v469
        %v673 = vunpack.c.l.b16 %v470
        %v674 = vunpack.c.l.b16 %v471
        %v675 = vunpack.c.l.b16 %v472
        %v676 = vunpack.c.l.b16 %v473
        %v677 = vunpack.c.l.b16 %v474
        %v678 = vunpack.c.l.b16 %v475
        %v679 = vunpack.c.l.b16 %v476
        %v680 = vunpack.c.l.b16 %v477
        %v681 = vunpack.c.l.b16 %v478
        %v682 = vunpack.c.l.b16 %v479
        %v683 = vunpack.c.l.b16 %v480
        %v684 = vunpack.c.l.b16 %v481
        %v685 = vunpack.c.l.b16 %v482
        %v686 = vunpack.c.l.b16 %v483
        %v687 = vunpack.c.l.b16 %v484
        %v688 = vunpack.c.l.b16 %v485
        %v689 = vunpack.c.l.b16 %v486
        %v690 = vunpack.c.l.b16 %v487
        %v691 = vunpack.c.l.b16 %v488
        %v692 = vunpack.c.l.b16 %v489
        %v693 = vunpack.c.l.b16 %v490
        %v694 = vunpack.c.l.b16 %v491
        %v695 = vunpack.c.l.b16 %v492
        %v696 = vunpack.c.l.b16 %v493
        %v697 = vunpack.c.l.b16 %v494
        %v698 = vunpack.c.l.b16 %v495
        %v699 = vunpack.c.l.b16 %v496
        %v700 = vunpack.c.l.b16 %v497
        %v701 = vunpack.c.l.b16 %v498
        %v702 = vunpack.c.l.b16 %v499
        %v703 = vunpack.c.l.b16 %v500
        %v704 = vunpack.c.l.b16 %v501
        %v705 = vunpack.c.l.b16 %v502
        %v706 = vunpack.c.l.b16 %v503
        %v707 = vunpack.c.l.b16 %v504
        %v708 = vunpack.c.l.b16 %v505
        %v709 = vunpack.c.l.b16 %v506
        %v710 = vunpack.c.l.b16 %v507
        %v711 = vunpack.c.l.b16 %v508
        %v712 = vunpack.c.l.b16 %v509
        %v713 = vunpack.c.l.b16 %v510
        %v714 = vunpack.c.l.b16 %v511
        %v715 = vunpack.c.l.b16 %v512
        %v716 = vunpack.c.l.b16 %v513
        %v717 = vunpack.c.l.b16 %v514
        %v718 = vunpack.c.l.b16 %v515
        %v719 = vunpack.c.l.b16 %v516
        %v720 = vunpack.c.l.b16 %v517
        %v721 = vunpack.c.l.b16 %v518
        %v722 = vunpack.c.l.b16 %v519
        %v723 = vunpack.c.l.b16 %v520
        %v724 = vunpack.c.l.b16 %v521
        %v725 = vunpack.c.l.b16 %v522
        %v726 = vunpack.c.l.b16 %v523
        %v727 = vunpack.c.l.b16 %v524
        %v728 = vunpack.c.l.b16 %v525
        %v729 = vpack.c.b16 %v632, %v631
        %v730 = vpack.c.b16 %v634, %v633
        %v731 = vpack.c.b16 %v636, %v635
        %v732 = vpack.c.b16 %v638, %v637
        %v733 = vpack.c.b16 %v640, %v639
        %v734 = vpack.c.b16 %v642, %v641
        %v735 = vpack.c.b16 %v644, %v643
        %v736 = vpack.c.b16 %v646, %v645
        %v737 = vpack.c.b16 %v648, %v647
        %v738 = vpack.c.b16 %v650, %v649
        %v739 = vpack.c.b16 %v652, %v651
        %v740 = vpack.c.b16 %v654, %v653
        %v741 = vpack.c.b16 %v656, %v655
        %v742 = vpack.c.b16 %v658, %v657
        %v743 = vpack.c.b16 %v660, %v659
        %v744 = vpack.c.b16 %v662, %v661
        %v745 = vpack.c.b16 %v664, %v663
        %v746 = vpack.c.b16 %v666, %v665
        %v747 = vpack.c.b16 %v668, %v667
        %v748 = vpack.c.b16 %v670, %v669
        %v749 = vpack.c.b16 %v672, %v671
        %v750 = vpack.c.b16 %v674, %v673
        %v751 = vpack.c.b16 %v676, %v675
        %v752 = vpack.c.b16 %v678, %v677
        %v753 = vpack.c.b16 %v680, %v679
        %v754 = vpack.c.b16 %v682, %v681
        %v755 = vpack.c.b16 %v684, %v683
        %v756 = vpack.c.b16 %v686, %v685
        %v757 = vpack.c.b16 %v688, %v687
        %v758 = vpack.c.b16 %v690, %v689
        %v759 = vpack.c.b16 %v692, %v691
        %v760 = vpack.c.b16 %v694, %v693
        %v761 = vpack.c.b16 %v696, %v695
        %v762 = vpack.c.b16 %v698, %v697
        %v763 = vpack.c.b16 %v700, %v699
        %v764 = vpack.c.b16 %v702, %v701
        %v765 = vpack.c.b16 %v704, %v703
        %v766 = vpack.c.b16 %v706, %v705
        %v767 = vpack.c.b16 %v708, %v707
        %v768 = vpack.c.b16 %v710, %v709
        %v769 = vpack.c.b16 %v712, %v711
        %v770 = vpack.c.b16 %v714, %v713
        %v771 = vpack.c.b16 %v716, %v715
        %v772 = vpack.c.b16 %v718, %v717
        %v773 = vpack.c.b16 %v720, %v719
        %v774 = vpack.c.b16 %v722, %v721
        %v775 = vpack.c.b16 %v724, %v723
        %v776 = vpack.c.b16 %v726, %v725
        %v777 = vpack.c.b16 %v728, %v727
        %vm827 = vcmask 130048
        %v829 = vsel %vm827, %v427, 0
        %831 = vmatprep.subr.bf16.mxu0 0
        %832 = vmatpush1.bf16.msra.mxu0 %v729
        %833 = vmatprep.subr.bf16.mxu0 0
        %834 = vmatpush1.bf16.msra.mxu0 %v730
        %835 = vmatprep.subr.bf16.mxu0 0
        %836 = vmatpush1.bf16.msra.mxu0 %v731
        %837 = vmatprep.subr.bf16.mxu0 0
        %838 = vmatpush1.bf16.msra.mxu0 %v732
        %839 = vmatprep.subr.bf16.mxu0 0
        %840 = vmatpush1.bf16.msra.mxu0 %v733
        %841 = vmatprep.subr.bf16.mxu0 0
        %842 = vmatpush1.bf16.msra.mxu0 %v734
        %843 = vmatprep.subr.bf16.mxu0 0
        %844 = vmatpush1.bf16.msra.mxu0 %v735
        %845 = vmatprep.subr.bf16.mxu0 0
        %846 = vmatpush1.bf16.msra.mxu0 %v736
        %847 = vmatprep.subr.bf16.mxu0 0
        %848 = vmatpush1.bf16.msra.mxu0 %v737
        %849 = vmatprep.subr.bf16.mxu0 0
        %850 = vmatpush1.bf16.msra.mxu0 %v738
        %851 = vmatprep.subr.bf16.mxu0 0
        %852 = vmatpush1.bf16.msra.mxu0 %v739
        %853 = vmatprep.subr.bf16.mxu0 0
        %854 = vmatpush1.bf16.msra.mxu0 %v740
        %855 = vmatprep.subr.bf16.mxu0 0
        %856 = vmatpush1.bf16.msra.mxu0 %v741
        %857 = vmatprep.subr.bf16.mxu0 0
        %858 = vmatpush1.bf16.msra.mxu0 %v742
        %859 = vmatprep.subr.bf16.mxu0 0
        %860 = vmatpush1.bf16.msra.mxu0 %v743
        %861 = vmatprep.subr.bf16.mxu0 0
        %862 = vmatpush1.bf16.msra.mxu0 %v744
        %863 = vmatprep.mubr.bf16.mxu0 %v422
        %864 = vmatmul.mubr.bf16.gmra.mrb[0].mxu0 %v421
        %v865 = vpop.f32.mrb[0].mxu0
        %v866 = vadd.f32 %v531, %v865
        %v867 = vpop.f32.mrb[0].mxu0
        %v868 = vpop.f32.mrb[0].mxu0
        %v869 = vpop.f32.mrb[0].mxu0
        %870 = vdwg.mxu0
        %871 = vmatprep.subr.bf16.mxu0 0
        %872 = vmatpush1.bf16.msra.mxu0 %v745
        %873 = vmatprep.subr.bf16.mxu0 0
        %874 = vmatpush1.bf16.msra.mxu0 %v746
        %875 = vmatprep.subr.bf16.mxu0 0
        %876 = vmatpush1.bf16.msra.mxu0 %v747
        %877 = vmatprep.subr.bf16.mxu0 0
        %878 = vmatpush1.bf16.msra.mxu0 %v748
        %879 = vmatprep.subr.bf16.mxu0 0
        %880 = vmatpush1.bf16.msra.mxu0 %v749
        %881 = vmatprep.subr.bf16.mxu0 0
        %882 = vmatpush1.bf16.msra.mxu0 %v750
        %883 = vmatprep.subr.bf16.mxu0 0
        %884 = vmatpush1.bf16.msra.mxu0 %v751
        %885 = vmatprep.subr.bf16.mxu0 0
        %886 = vmatpush1.bf16.msra.mxu0 %v752
        %887 = vmatprep.subr.bf16.mxu0 0
        %888 = vmatpush1.bf16.msra.mxu0 %v753
        %889 = vmatprep.subr.bf16.mxu0 0
        %890 = vmatpush1.bf16.msra.mxu0 %v754
        %891 = vmatprep.subr.bf16.mxu0 0
        %892 = vmatpush1.bf16.msra.mxu0 %v755
        %893 = vmatprep.subr.bf16.mxu0 0
        %894 = vmatpush1.bf16.msra.mxu0 %v756
        %895 = vmatprep.subr.bf16.mxu0 0
        %896 = vmatpush1.bf16.msra.mxu0 %v757
        %897 = vmatprep.subr.bf16.mxu0 0
        %898 = vmatpush1.bf16.msra.mxu0 %v758
        %899 = vmatprep.subr.bf16.mxu0 0
        %900 = vmatpush1.bf16.msra.mxu0 %v759
        %901 = vmatprep.subr.bf16.mxu0 0
        %902 = vmatpush1.bf16.msra.mxu0 %v760
        %903 = vmatprep.mubr.bf16.mxu0 %v424
        %904 = vmatmul.mubr.bf16.gmra.mrb[0].mxu0 %v423
        %v905 = vpop.f32.mrb[0].mxu0
        %v906 = vadd.f32 %v866, %v905
        %v907 = vpop.f32.mrb[0].mxu0
        %v908 = vpop.f32.mrb[0].mxu0
        %v909 = vpop.f32.mrb[0].mxu0
        %910 = vdwg.mxu0
        %911 = vmatprep.subr.bf16.mxu0 0
        %912 = vmatpush1.bf16.msra.mxu0 %v761
        %913 = vmatprep.subr.bf16.mxu0 0
        %914 = vmatpush1.bf16.msra.mxu0 %v762
        %915 = vmatprep.subr.bf16.mxu0 0
        %916 = vmatpush1.bf16.msra.mxu0 %v763
        %917 = vmatprep.subr.bf16.mxu0 0
        %918 = vmatpush1.bf16.msra.mxu0 %v764
        %919 = vmatprep.subr.bf16.mxu0 0
        %920 = vmatpush1.bf16.msra.mxu0 %v765
        %921 = vmatprep.subr.bf16.mxu0 0
        %922 = vmatpush1.bf16.msra.mxu0 %v766
        %923 = vmatprep.subr.bf16.mxu0 0
        %924 = vmatpush1.bf16.msra.mxu0 %v767
        %925 = vmatprep.subr.bf16.mxu0 0
        %926 = vmatpush1.bf16.msra.mxu0 %v768
        %927 = vmatprep.subr.bf16.mxu0 0
        %928 = vmatpush1.bf16.msra.mxu0 %v769
        %929 = vmatprep.subr.bf16.mxu0 0
        %930 = vmatpush1.bf16.msra.mxu0 %v770
        %931 = vmatprep.subr.bf16.mxu0 0
        %932 = vmatpush1.bf16.msra.mxu0 %v771
        %933 = vmatprep.subr.bf16.mxu0 0
        %934 = vmatpush1.bf16.msra.mxu0 %v772
        %935 = vmatprep.subr.bf16.mxu0 0
        %936 = vmatpush1.bf16.msra.mxu0 %v773
        %937 = vmatprep.subr.bf16.mxu0 0
        %938 = vmatpush1.bf16.msra.mxu0 %v774
        %939 = vmatprep.subr.bf16.mxu0 0
        %940 = vmatpush1.bf16.msra.mxu0 %v775
        %941 = vmatprep.subr.bf16.mxu0 0
        %942 = vmatpush1.bf16.msra.mxu0 %v776
        %943 = vmatprep.mubr.bf16.mxu0 %v426
        %944 = vmatmul.mubr.bf16.gmra.mrb[0].mxu0 %v425
        %v945 = vpop.f32.mrb[0].mxu0
        %v946 = vadd.f32 %v906, %v945
        %v947 = vpop.f32.mrb[0].mxu0
        %v948 = vpop.f32.mrb[0].mxu0
        %v949 = vpop.f32.mrb[0].mxu0
        %950 = vdwg.mxu0
        %951 = vmatprep.subr.bf16.mxu0 0
        %952 = vmatpush1.bf16.msra.mxu0 %v777
        %953 = vmatprep.subr.bf16.mxu0 0
        %954 = vmatpush1.bf16.msra.mxu0 0
        %955 = vmatprep.subr.bf16.mxu0 0
        %956 = vmatpush1.bf16.msra.mxu0 0
        %957 = vmatprep.subr.bf16.mxu0 0
        %958 = vmatpush1.bf16.msra.mxu0 0
        %959 = vmatprep.subr.bf16.mxu0 0
        %960 = vmatpush1.bf16.msra.mxu0 0
        %961 = vmatprep.subr.bf16.mxu0 0
        %962 = vmatpush1.bf16.msra.mxu0 0
        %963 = vmatprep.subr.bf16.mxu0 0
        %964 = vmatpush1.bf16.msra.mxu0 0
        %965 = vmatprep.subr.bf16.mxu0 0
        %966 = vmatpush1.bf16.msra.mxu0 0
        %967 = vmatprep.subr.bf16.mxu0 0
        %968 = vmatpush1.bf16.msra.mxu0 0
        %969 = vmatprep.subr.bf16.mxu0 0
        %970 = vmatpush1.bf16.msra.mxu0 0
        %971 = vmatprep.subr.bf16.mxu0 0
        %972 = vmatpush1.bf16.msra.mxu0 0
        %973 = vmatprep.subr.bf16.mxu0 0
        %974 = vmatpush1.bf16.msra.mxu0 0
        %975 = vmatprep.subr.bf16.mxu0 0
        %976 = vmatpush1.bf16.msra.mxu0 0
        %977 = vmatprep.subr.bf16.mxu0 0
        %978 = vmatpush1.bf16.msra.mxu0 0
        %979 = vmatprep.subr.bf16.mxu0 0
        %980 = vmatpush1.bf16.msra.mxu0 0
        %981 = vmatprep.subr.bf16.mxu0 0
        %982 = vmatpush1.bf16.msra.mxu0 0
        %983 = vmatprep.mubr.bf16.mxu0 0
        %984 = vmatmul.mubr.bf16.gmra.mrb[0].mxu0 %v829
        %v985 = vpop.f32.mrb[0].mxu0
        %v986 = vadd.f32 %v946, %v985
        %v987 = vpop.f32.mrb[0].mxu0
        %v988 = vpop.f32.mrb[0].mxu0
        %v989 = vpop.f32.mrb[0].mxu0
        %990 = vdwg.mxu0
        %v991 = vmax.f32 %v986, 0.0
        %v992 = vld [vmem:[%s4] sm:$0xff]
        %v993 = vld [vmem:[%s4 + $0x8] sm:$0xff]
        %v994 = vld [vmem:[%s4 + $0x10] sm:$0xff]
        %v995 = vld [vmem:[%s4 + $0x18] sm:$0xff]
        %v996 = vld [vmem:[%s4 + $0x20] sm:$0xff]
        %v997 = vld [vmem:[%s4 + $0x28] sm:$0xff]
        %v998 = vld [vmem:[%s4 + $0x30] sm:$0xff]
        %v999 = vld [vmem:[%s4 + $0x38] sm:$0xff]
        %v1000 = vld [vmem:[%s4 + $0x40] sm:$0xff]
        %v1001 = vld [vmem:[%s4 + $0x48] sm:$0xff]
        %v1002 = vld [vmem:[%s4 + $0x50] sm:$0xff]
        %v1003 = vld [vmem:[%s4 + $0x58] sm:$0xff]
        %v1004 = vld [vmem:[%s4 + $0x60] sm:$0xff]
        %v1005 = vld [vmem:[%s4 + $0x68] sm:$0xff]
        %v1006 = vld [vmem:[%s4 + $0x70] sm:$0xff]
        %v1007 = vld [vmem:[%s4 + $0x78] sm:$0xff]
        %v1008 = vld [vmem:[%s5] sm:$0x1]
        %v1010 = vlaneseq
        %v1011 = vshrl.u32 %v1010, 7
        %v1012 = vsub.s32 0, %v1011
        %v1013 = vrot.slane %v1008, %v1012
        %1015 = vmatprep.subr.mxu0 0.0
        %1016 = vmatpush1.msra.mxu0 %v992
        %1017 = vmatprep.subr.mxu0 0.0
        %1018 = vmatpush1.msra.mxu0 %v993
        %1019 = vmatprep.subr.mxu0 0.0
        %1020 = vmatpush1.msra.mxu0 %v994
        %1021 = vmatprep.subr.mxu0 0.0
        %1022 = vmatpush1.msra.mxu0 %v995
        %1023 = vmatprep.subr.mxu0 0.0
        %1024 = vmatpush1.msra.mxu0 %v996
        %1025 = vmatprep.subr.mxu0 0.0
        %1026 = vmatpush1.msra.mxu0 %v997
        %1027 = vmatprep.subr.mxu0 0.0
        %1028 = vmatpush1.msra.mxu0 %v998
        %1029 = vmatprep.subr.mxu0 0.0
        %1030 = vmatpush1.msra.mxu0 %v999
        %1031 = vmatprep.subr.mxu0 0.0
        %1032 = vmatpush1.msra.mxu0 %v1000
        %1033 = vmatprep.subr.mxu0 0.0
        %1034 = vmatpush1.msra.mxu0 %v1001
        %1035 = vmatprep.subr.mxu0 0.0
        %1036 = vmatpush1.msra.mxu0 %v1002
        %1037 = vmatprep.subr.mxu0 0.0
        %1038 = vmatpush1.msra.mxu0 %v1003
        %1039 = vmatprep.subr.mxu0 0.0
        %1040 = vmatpush1.msra.mxu0 %v1004
        %1041 = vmatprep.subr.mxu0 0.0
        %1042 = vmatpush1.msra.mxu0 %v1005
        %1043 = vmatprep.subr.mxu0 0.0
        %1044 = vmatpush1.msra.mxu0 %v1006
        %1045 = vmatprep.subr.mxu0 0.0
        %1046 = vmatpush1.msra.mxu0 %v1007
        %1047 = vmatprep.subr.mxu0 0.0
        %1048 = vmatpush1.msra.mxu0 0.0
        %1049 = vmatprep.subr.mxu0 0.0
        %1050 = vmatpush1.msra.mxu0 0.0
        %1051 = vmatprep.subr.mxu0 0.0
        %1052 = vmatpush1.msra.mxu0 0.0
        %1053 = vmatprep.subr.mxu0 0.0
        %1054 = vmatpush1.msra.mxu0 0.0
        %1055 = vmatprep.subr.mxu0 0.0
        %1056 = vmatpush1.msra.mxu0 0.0
        %1057 = vmatprep.subr.mxu0 0.0
        %1058 = vmatpush1.msra.mxu0 0.0
        %1059 = vmatprep.subr.mxu0 0.0
        %1060 = vmatpush1.msra.mxu0 0.0
        %1061 = vmatprep.subr.mxu0 0.0
        %1062 = vmatpush1.msra.mxu0 0.0
        %1063 = vmatprep.subr.mxu0 0.0
        %1064 = vmatpush1.msra.mxu0 0.0
        %1065 = vmatprep.subr.mxu0 0.0
        %1066 = vmatpush1.msra.mxu0 0.0
        %1067 = vmatprep.subr.mxu0 0.0
        %1068 = vmatpush1.msra.mxu0 0.0
        %1069 = vmatprep.subr.mxu0 0.0
        %1070 = vmatpush1.msra.mxu0 0.0
        %1071 = vmatprep.subr.mxu0 0.0
        %1072 = vmatpush1.msra.mxu0 0.0
        %1073 = vmatprep.subr.mxu0 0.0
        %1074 = vmatpush1.msra.mxu0 0.0
        %1075 = vmatprep.subr.mxu0 0.0
        %1076 = vmatpush1.msra.mxu0 0.0
        %1077 = vmatprep.subr.mxu0 0.0
        %1078 = vmatpush1.msra.mxu0 0.0
        %1079 = vmatprep.mubr.f32.mxu0 0.0
        %1080 = vmatmul.mubr.f32.gmra.mrb[0].mxu0 %v991
        %v1081 = vpop.f32.mrb[0].mxu0
        %v1082 = vadd.f32 %v1013, %v1081
        %v1083 = vpop.f32.mrb[0].mxu0
        %1084 = vdwg.mxu0
        %v1085 = vmul.f32 %v1082, 0.5
        %v1086 = vmul.f32 %v1085, 1.442695
        %v1087 = vpow.pop %v1086
        %v1088 = vld [vmem:[%s408] sm:$0xff]
        %1090 = vrot.lane.b32.xlu0 %v1087, 118
        %v1091 = vpop.permute.xlu0 %1090
        %v1093 = vmul.f32 %v1088, %v1091
        %v1094 = vadd.f32 %v1082, %v1093
        %v1095 = vld [vmem:[%s6] sm:$0xff]
        %v1096 = vld [vmem:[%s6 + $0x8] sm:$0x3]
        %v1097 = vld [vmem:[%s7] sm:$0x1]
        %v1099 = vlaneseq
        %v1100 = vshrl.u32 %v1099, 7
        %v1101 = vsub.s32 0, %v1100
        %v1102 = vrot.slane %v1097, %v1101
        %vm1104 = vcmask 80896
        %v1106 = vsel %vm1104, %v1094, 0
        %vm1108 = vcmask 1041408
        %v1110 = vsel %vm1108, %v1096, 0
        %1112 = vmatprep.subr.mxu0 0.0
        %1113 = vmatpush1.msra.mxu0 %v1095
        %1114 = vmatprep.subr.mxu0 0.0
        %1115 = vmatpush1.msra.mxu0 %v1110
        %1116 = vmatprep.subr.mxu0 0.0
        %1117 = vmatpush1.msra.mxu0 0.0
        %1118 = vmatprep.subr.mxu0 0.0
        %1119 = vmatpush1.msra.mxu0 0.0
        %1120 = vmatprep.subr.mxu0 0.0
        %1121 = vmatpush1.msra.mxu0 0.0
        %1122 = vmatprep.subr.mxu0 0.0
        %1123 = vmatpush1.msra.mxu0 0.0
        %1124 = vmatprep.subr.mxu0 0.0
        %1125 = vmatpush1.msra.mxu0 0.0
        %1126 = vmatprep.subr.mxu0 0.0
        %1127 = vmatpush1.msra.mxu0 0.0
        %1128 = vmatprep.subr.mxu0 0.0
        %1129 = vmatpush1.msra.mxu0 0.0
        %1130 = vmatprep.subr.mxu0 0.0
        %1131 = vmatpush1.msra.mxu0 0.0
        %1132 = vmatprep.subr.mxu0 0.0
        %1133 = vmatpush1.msra.mxu0 0.0
        %1134 = vmatprep.subr.mxu0 0.0
        %1135 = vmatpush1.msra.mxu0 0.0
        %1136 = vmatprep.subr.mxu0 0.0
        %1137 = vmatpush1.msra.mxu0 0.0
        %1138 = vmatprep.subr.mxu0 0.0
        %1139 = vmatpush1.msra.mxu0 0.0
        %1140 = vmatprep.subr.mxu0 0.0
        %1141 = vmatpush1.msra.mxu0 0.0
        %1142 = vmatprep.subr.mxu0 0.0
        %1143 = vmatpush1.msra.mxu0 0.0
        %1144 = vmatprep.subr.mxu0 0.0
        %1145 = vmatpush1.msra.mxu0 0.0
        %1146 = vmatprep.subr.mxu0 0.0
        %1147 = vmatpush1.msra.mxu0 0.0
        %1148 = vmatprep.subr.mxu0 0.0
        %1149 = vmatpush1.msra.mxu0 0.0
        %1150 = vmatprep.subr.mxu0 0.0
        %1151 = vmatpush1.msra.mxu0 0.0
        %1152 = vmatprep.subr.mxu0 0.0
        %1153 = vmatpush1.msra.mxu0 0.0
        %1154 = vmatprep.subr.mxu0 0.0
        %1155 = vmatpush1.msra.mxu0 0.0
        %1156 = vmatprep.subr.mxu0 0.0
        %1157 = vmatpush1.msra.mxu0 0.0
        %1158 = vmatprep.subr.mxu0 0.0
        %1159 = vmatpush1.msra.mxu0 0.0
        %1160 = vmatprep.subr.mxu0 0.0
        %1161 = vmatpush1.msra.mxu0 0.0
        %1162 = vmatprep.subr.mxu0 0.0
        %1163 = vmatpush1.msra.mxu0 0.0
        %1164 = vmatprep.subr.mxu0 0.0
        %1165 = vmatpush1.msra.mxu0 0.0
        %1166 = vmatprep.subr.mxu0 0.0
        %1167 = vmatpush1.msra.mxu0 0.0
        %1168 = vmatprep.subr.mxu0 0.0
        %1169 = vmatpush1.msra.mxu0 0.0
        %1170 = vmatprep.subr.mxu0 0.0
        %1171 = vmatpush1.msra.mxu0 0.0
        %1172 = vmatprep.subr.mxu0 0.0
        %1173 = vmatpush1.msra.mxu0 0.0
        %1174 = vmatprep.subr.mxu0 0.0
        %1175 = vmatpush1.msra.mxu0 0.0
        %1176 = vmatprep.mubr.f32.mxu0 0.0
        %1177 = vmatmul.mubr.f32.gmra.mrb[0].mxu0 %v1106
        %v1178 = vpop.f32.mrb[0].mxu0
        %v1179 = vadd.f32 %v1102, %v1178
        %v1180 = vpop.f32.mrb[0].mxu0
        %1181 = vdwg.mxu0
        %v1182 = vmax.f32 %v1179, 0.0
        %v1183 = vpack.c.bf16 %v1182, %v1182
        %v1184 = vld [vmem:[%s8] sm:$0xff]
        %v1185 = vld [vmem:[%s8 + $0x8] sm:$0xff]
        %v1186 = vld [vmem:[%s8 + $0x10] sm:$0xff]
        %v1187 = vld [vmem:[%s8 + $0x18] sm:$0xf]
        %v1188 = vld [vmem:[%s8 + $0x1c] sm:$0xff]
        %v1189 = vld [vmem:[%s8 + $0x24] sm:$0xff]
        %v1190 = vld [vmem:[%s8 + $0x2c] sm:$0xff]
        %v1191 = vld [vmem:[%s8 + $0x34] sm:$0xf]
        %v1192 = vld [vmem:[%s8 + $0x38] sm:$0xff]
        %v1193 = vld [vmem:[%s8 + $0x40] sm:$0xff]
        %v1194 = vld [vmem:[%s8 + $0x48] sm:$0xff]
        %v1195 = vld [vmem:[%s8 + $0x50] sm:$0xf]
        %v1196 = vld [vmem:[%s8 + $0x54] sm:$0xff]
        %v1197 = vld [vmem:[%s8 + $0x5c] sm:$0xff]
        %v1198 = vld [vmem:[%s8 + $0x64] sm:$0xff]
        %v1199 = vld [vmem:[%s8 + $0x6c] sm:$0xf]
        %v1200 = vld [vmem:[%s8 + $0x70] sm:$0xff]
        %v1201 = vld [vmem:[%s8 + $0x78] sm:$0xff]
        %v1202 = vld [vmem:[%s8 + $0x80] sm:$0xff]
        %v1203 = vld [vmem:[%s8 + $0x88] sm:$0xf]
        %v1204 = vld [vmem:[%s8 + $0x8c] sm:$0xff]
        %v1205 = vld [vmem:[%s8 + $0x94] sm:$0xff]
        %v1206 = vld [vmem:[%s8 + $0x9c] sm:$0xff]
        %v1207 = vld [vmem:[%s8 + $0xa4] sm:$0xf]
        %v1208 = vld [vmem:[%s8 + $0xa8] sm:$0xff]
        %v1209 = vld [vmem:[%s8 + $0xb0] sm:$0xff]
        %v1210 = vld [vmem:[%s8 + $0xb8] sm:$0xff]
        %v1211 = vld [vmem:[%s8 + $0xc0] sm:$0xf]
        %v1212 = vld [vmem:[%s8 + $0xc4] sm:$0xff]
        %v1213 = vld [vmem:[%s8 + $0xcc] sm:$0xff]
        %v1214 = vld [vmem:[%s8 + $0xd4] sm:$0xff]
        %v1215 = vld [vmem:[%s8 + $0xdc] sm:$0xf]
        %v1216 = vld [vmem:[%s8 + $0xe0] sm:$0xff]
        %v1217 = vld [vmem:[%s8 + $0xe8] sm:$0xff]
        %v1218 = vld [vmem:[%s8 + $0xf0] sm:$0xff]
        %v1219 = vld [vmem:[%s8 + $0xf8] sm:$0xf]
        %v1220 = vld [vmem:[%s8 + $0xfc] sm:$0xff]
        %v1221 = vld [vmem:[%s8 + $0x104] sm:$0xff]
        %v1222 = vld [vmem:[%s8 + $0x10c] sm:$0xff]
        %v1223 = vld [vmem:[%s8 + $0x114] sm:$0xf]
        %v1224 = vld [vmem:[%s8 + $0x118] sm:$0xff]
        %v1225 = vld [vmem:[%s8 + $0x120] sm:$0xff]
        %v1226 = vld [vmem:[%s8 + $0x128] sm:$0xff]
        %v1227 = vld [vmem:[%s8 + $0x130] sm:$0xf]
        %v1228 = vld [vmem:[%s8 + $0x134] sm:$0xff]
        %v1229 = vld [vmem:[%s8 + $0x13c] sm:$0xff]
        %v1230 = vld [vmem:[%s8 + $0x144] sm:$0xff]
        %v1231 = vld [vmem:[%s8 + $0x14c] sm:$0xf]
        %v1232 = vld [vmem:[%s8 + $0x150] sm:$0xff]
        %v1233 = vld [vmem:[%s8 + $0x158] sm:$0xff]
        %v1234 = vld [vmem:[%s8 + $0x160] sm:$0xff]
        %v1235 = vld [vmem:[%s8 + $0x168] sm:$0xf]
        %v1236 = vld [vmem:[%s8 + $0x16c] sm:$0xff]
        %v1237 = vld [vmem:[%s8 + $0x174] sm:$0xff]
        %v1238 = vld [vmem:[%s8 + $0x17c] sm:$0xff]
        %v1239 = vld [vmem:[%s8 + $0x184] sm:$0xf]
        %v1240 = vld [vmem:[%s8 + $0x188] sm:$0xff]
        %v1241 = vld [vmem:[%s8 + $0x190] sm:$0xff]
        %v1242 = vld [vmem:[%s8 + $0x198] sm:$0xff]
        %v1243 = vld [vmem:[%s8 + $0x1a0] sm:$0xf]
        %v1244 = vld [vmem:[%s8 + $0x1a4] sm:$0xff]
        %v1245 = vld [vmem:[%s8 + $0x1ac] sm:$0xff]
        %v1246 = vld [vmem:[%s8 + $0x1b4] sm:$0xff]
        %v1247 = vld [vmem:[%s8 + $0x1bc] sm:$0xf]
        %v1248 = vld [vmem:[%s9] sm:$0x7f]
        %v1250 = vlaneseq
        %v1251 = vshrl.u32 %v1250, 7
        %v1252 = vsub.s32 0, %v1251
        %v1253 = vrot.slane %v1248, %v1252
        %v1254 = vlaneseq
        %v1255 = vshrl.u32 %v1254, 7
        %v1256 = vsub.s32 1, %v1255
        %v1257 = vrot.slane %v1248, %v1256
        %v1258 = vlaneseq
        %v1259 = vshrl.u32 %v1258, 7
        %v1260 = vsub.s32 2, %v1259
        %v1261 = vrot.slane %v1248, %v1260
        %v1262 = vlaneseq
        %v1263 = vshrl.u32 %v1262, 7
        %v1264 = vsub.s32 3, %v1263
        %v1265 = vrot.slane %v1248, %v1264
        %v1266 = vlaneseq
        %v1267 = vshrl.u32 %v1266, 7
        %v1268 = vsub.s32 4, %v1267
        %v1269 = vrot.slane %v1248, %v1268
        %v1270 = vlaneseq
        %v1271 = vshrl.u32 %v1270, 7
        %v1272 = vsub.s32 5, %v1271
        %v1273 = vrot.slane %v1248, %v1272
        %v1274 = vlaneseq
        %v1275 = vshrl.u32 %v1274, 7
        %v1276 = vsub.s32 6, %v1275
        %v1277 = vrot.slane %v1248, %v1276
        %v1349 = vunpack.c.l.b16 %v1184
        %v1350 = vunpack.c.h.b16 %v1184
        %v1351 = vunpack.c.l.b16 %v1185
        %v1352 = vunpack.c.h.b16 %v1185
        %v1353 = vunpack.c.l.b16 %v1186
        %v1354 = vunpack.c.h.b16 %v1186
        %v1355 = vunpack.c.l.b16 %v1187
        %v1356 = vunpack.c.l.b16 %v1188
        %v1357 = vunpack.c.h.b16 %v1188
        %v1358 = vunpack.c.l.b16 %v1189
        %v1359 = vunpack.c.h.b16 %v1189
        %v1360 = vunpack.c.l.b16 %v1190
        %v1361 = vunpack.c.h.b16 %v1190
        %v1362 = vunpack.c.l.b16 %v1191
        %v1363 = vunpack.c.l.b16 %v1192
        %v1364 = vunpack.c.h.b16 %v1192
        %v1365 = vunpack.c.l.b16 %v1193
        %v1366 = vunpack.c.h.b16 %v1193
        %v1367 = vunpack.c.l.b16 %v1194
        %v1368 = vunpack.c.h.b16 %v1194
        %v1369 = vunpack.c.l.b16 %v1195
        %v1370 = vunpack.c.l.b16 %v1196
        %v1371 = vunpack.c.h.b16 %v1196
        %v1372 = vunpack.c.l.b16 %v1197
        %v1373 = vunpack.c.h.b16 %v1197
        %v1374 = vunpack.c.l.b16 %v1198
        %v1375 = vunpack.c.h.b16 %v1198
        %v1376 = vunpack.c.l.b16 %v1199
        %v1377 = vunpack.c.l.b16 %v1200
        %v1378 = vunpack.c.h.b16 %v1200
        %v1379 = vunpack.c.l.b16 %v1201
        %v1380 = vunpack.c.h.b16 %v1201
        %v1381 = vunpack.c.l.b16 %v1202
        %v1382 = vunpack.c.h.b16 %v1202
        %v1383 = vunpack.c.l.b16 %v1203
        %v1384 = vunpack.c.l.b16 %v1204
        %v1385 = vunpack.c.h.b16 %v1204
        %v1386 = vunpack.c.l.b16 %v1205
        %v1387 = vunpack.c.h.b16 %v1205
        %v1388 = vunpack.c.l.b16 %v1206
        %v1389 = vunpack.c.h.b16 %v1206
        %v1390 = vunpack.c.l.b16 %v1207
        %v1391 = vunpack.c.l.b16 %v1208
        %v1392 = vunpack.c.h.b16 %v1208
        %v1393 = vunpack.c.l.b16 %v1209
        %v1394 = vunpack.c.h.b16 %v1209
        %v1395 = vunpack.c.l.b16 %v1210
        %v1396 = vunpack.c.h.b16 %v1210
        %v1397 = vunpack.c.l.b16 %v1211
        %v1398 = vunpack.c.l.b16 %v1212
        %v1399 = vunpack.c.h.b16 %v1212
        %v1400 = vunpack.c.l.b16 %v1213
        %v1401 = vunpack.c.h.b16 %v1213
        %v1402 = vunpack.c.l.b16 %v1214
        %v1403 = vunpack.c.h.b16 %v1214
        %v1404 = vunpack.c.l.b16 %v1215
        %v1405 = vunpack.c.l.b16 %v1216
        %v1406 = vunpack.c.h.b16 %v1216
        %v1407 = vunpack.c.l.b16 %v1217
        %v1408 = vunpack.c.h.b16 %v1217
        %v1409 = vunpack.c.l.b16 %v1218
        %v1410 = vunpack.c.h.b16 %v1218
        %v1411 = vunpack.c.l.b16 %v1219
        %v1412 = vunpack.c.l.b16 %v1220
        %v1413 = vunpack.c.h.b16 %v1220
        %v1414 = vunpack.c.l.b16 %v1221
        %v1415 = vunpack.c.h.b16 %v1221
        %v1416 = vunpack.c.l.b16 %v1222
        %v1417 = vunpack.c.h.b16 %v1222
        %v1418 = vunpack.c.l.b16 %v1223
        %v1419 = vunpack.c.l.b16 %v1224
        %v1420 = vunpack.c.h.b16 %v1224
        %v1421 = vunpack.c.l.b16 %v1225
        %v1422 = vunpack.c.h.b16 %v1225
        %v1423 = vunpack.c.l.b16 %v1226
        %v1424 = vunpack.c.h.b16 %v1226
        %v1425 = vunpack.c.l.b16 %v1227
        %v1426 = vunpack.c.l.b16 %v1228
        %v1427 = vunpack.c.h.b16 %v1228
        %v1428 = vunpack.c.l.b16 %v1229
        %v1429 = vunpack.c.h.b16 %v1229
        %v1430 = vunpack.c.l.b16 %v1230
        %v1431 = vunpack.c.h.b16 %v1230
        %v1432 = vunpack.c.l.b16 %v1231
        %v1433 = vunpack.c.l.b16 %v1232
        %v1434 = vunpack.c.h.b16 %v1232
        %v1435 = vunpack.c.l.b16 %v1233
        %v1436 = vunpack.c.h.b16 %v1233
        %v1437 = vunpack.c.l.b16 %v1234
        %v1438 = vunpack.c.h.b16 %v1234
        %v1439 = vunpack.c.l.b16 %v1235
        %v1440 = vunpack.c.l.b16 %v1236
        %v1441 = vunpack.c.h.b16 %v1236
        %v1442 = vunpack.c.l.b16 %v1237
        %v1443 = vunpack.c.h.b16 %v1237
        %v1444 = vunpack.c.l.b16 %v1238
        %v1445 = vunpack.c.h.b16 %v1238
        %v1446 = vunpack.c.l.b16 %v1239
        %v1447 = vunpack.c.l.b16 %v1240
        %v1448 = vunpack.c.h.b16 %v1240
        %v1449 = vunpack.c.l.b16 %v1241
        %v1450 = vunpack.c.h.b16 %v1241
        %v1451 = vunpack.c.l.b16 %v1242
        %v1452 = vunpack.c.h.b16 %v1242
        %v1453 = vunpack.c.l.b16 %v1243
        %v1454 = vunpack.c.l.b16 %v1244
        %v1455 = vunpack.c.h.b16 %v1244
        %v1456 = vunpack.c.l.b16 %v1245
        %v1457 = vunpack.c.h.b16 %v1245
        %v1458 = vunpack.c.l.b16 %v1246
        %v1459 = vunpack.c.h.b16 %v1246
        %v1460 = vunpack.c.l.b16 %v1247
        %v1461 = vpack.c.b16 %v1356, %v1349
        %v1462 = vpack.c.b16 %v1357, %v1350
        %v1463 = vpack.c.b16 %v1358, %v1351
        %v1464 = vpack.c.b16 %v1359, %v1352
        %v1465 = vpack.c.b16 %v1360, %v1353
        %v1466 = vpack.c.b16 %v1361, %v1354
        %v1467 = vpack.c.b16 %v1362, %v1355
        %v1468 = vpack.c.b16 %v1370, %v1363
        %v1469 = vpack.c.b16 %v1371, %v1364
        %v1470 = vpack.c.b16 %v1372, %v1365
        %v1471 = vpack.c.b16 %v1373, %v1366
        %v1472 = vpack.c.b16 %v1374, %v1367
        %v1473 = vpack.c.b16 %v1375, %v1368
        %v1474 = vpack.c.b16 %v1376, %v1369
        %v1475 = vpack.c.b16 %v1384, %v1377
        %v1476 = vpack.c.b16 %v1385, %v1378
        %v1477 = vpack.c.b16 %v1386, %v1379
        %v1478 = vpack.c.b16 %v1387, %v1380
        %v1479 = vpack.c.b16 %v1388, %v1381
        %v1480 = vpack.c.b16 %v1389, %v1382
        %v1481 = vpack.c.b16 %v1390, %v1383
        %v1482 = vpack.c.b16 %v1398, %v1391
        %v1483 = vpack.c.b16 %v1399, %v1392
        %v1484 = vpack.c.b16 %v1400, %v1393
        %v1485 = vpack.c.b16 %v1401, %v1394
        %v1486 = vpack.c.b16 %v1402, %v1395
        %v1487 = vpack.c.b16 %v1403, %v1396
        %v1488 = vpack.c.b16 %v1404, %v1397
        %v1489 = vpack.c.b16 %v1412, %v1405
        %v1490 = vpack.c.b16 %v1413, %v1406
        %v1491 = vpack.c.b16 %v1414, %v1407
        %v1492 = vpack.c.b16 %v1415, %v1408
        %v1493 = vpack.c.b16 %v1416, %v1409
        %v1494 = vpack.c.b16 %v1417, %v1410
        %v1495 = vpack.c.b16 %v1418, %v1411
        %v1496 = vpack.c.b16 %v1426, %v1419
        %v1497 = vpack.c.b16 %v1427, %v1420
        %v1498 = vpack.c.b16 %v1428, %v1421
        %v1499 = vpack.c.b16 %v1429, %v1422
        %v1500 = vpack.c.b16 %v1430, %v1423
        %v1501 = vpack.c.b16 %v1431, %v1424
        %v1502 = vpack.c.b16 %v1432, %v1425
        %v1503 = vpack.c.b16 %v1440, %v1433
        %v1504 = vpack.c.b16 %v1441, %v1434
        %v1505 = vpack.c.b16 %v1442, %v1435
        %v1506 = vpack.c.b16 %v1443, %v1436
        %v1507 = vpack.c.b16 %v1444, %v1437
        %v1508 = vpack.c.b16 %v1445, %v1438
        %v1509 = vpack.c.b16 %v1446, %v1439
        %v1510 = vpack.c.b16 %v1454, %v1447
        %v1511 = vpack.c.b16 %v1455, %v1448
        %v1512 = vpack.c.b16 %v1456, %v1449
        %v1513 = vpack.c.b16 %v1457, %v1450
        %v1514 = vpack.c.b16 %v1458, %v1451
        %v1515 = vpack.c.b16 %v1459, %v1452
        %v1516 = vpack.c.b16 %v1460, %v1453
        %1573 = vmatprep.subr.bf16.mxu0 %v1462
        %1574 = vmatpush1.bf16.msra.mxu0 %v1461
        %1575 = vmatprep.subr.bf16.mxu0 %v1469
        %1576 = vmatpush1.bf16.msra.mxu0 %v1468
        %1577 = vmatprep.subr.bf16.mxu0 %v1476
        %1578 = vmatpush1.bf16.msra.mxu0 %v1475
        %1579 = vmatprep.subr.bf16.mxu0 %v1483
        %1580 = vmatpush1.bf16.msra.mxu0 %v1482
        %1581 = vmatprep.subr.bf16.mxu0 %v1490
        %1582 = vmatpush1.bf16.msra.mxu0 %v1489
        %1583 = vmatprep.subr.bf16.mxu0 %v1497
        %1584 = vmatpush1.bf16.msra.mxu0 %v1496
        %1585 = vmatprep.subr.bf16.mxu0 %v1504
        %1586 = vmatpush1.bf16.msra.mxu0 %v1503
        %1587 = vmatprep.subr.bf16.mxu0 %v1511
        %1588 = vmatpush1.bf16.msra.mxu0 %v1510
        %1589 = vmatprep.subr.bf16.mxu0 0
        %1590 = vmatpush1.bf16.msra.mxu0 0
        %1591 = vmatprep.subr.bf16.mxu0 0
        %1592 = vmatpush1.bf16.msra.mxu0 0
        %1593 = vmatprep.subr.bf16.mxu0 0
        %1594 = vmatpush1.bf16.msra.mxu0 0
        %1595 = vmatprep.subr.bf16.mxu0 0
        %1596 = vmatpush1.bf16.msra.mxu0 0
        %1597 = vmatprep.subr.bf16.mxu0 0
        %1598 = vmatpush1.bf16.msra.mxu0 0
        %1599 = vmatprep.subr.bf16.mxu0 0
        %1600 = vmatpush1.bf16.msra.mxu0 0
        %1601 = vmatprep.subr.bf16.mxu0 0
        %1602 = vmatpush1.bf16.msra.mxu0 0
        %1603 = vmatprep.subr.bf16.mxu0 0
        %1604 = vmatpush1.bf16.msra.mxu0 0
        %1605 = vmatprep.mubr.bf16.mxu0 0
        %1606 = vmatmul.mubr.bf16.gmra.mrb[0].mxu0 %v1183
        %v1607 = vpop.f32.mrb[0].mxu0
        %v1608 = vadd.f32 %v1253, %v1607
        %v1609 = vpop.f32.mrb[0].mxu0
        %v1610 = vadd.f32 %v1257, %v1609
        %v1611 = vpop.f32.mrb[0].mxu0
        %v1612 = vpop.f32.mrb[0].mxu0
        %1613 = vdwg.mxu0
        %1614 = vmatprep.subr.bf16.mxu0 %v1464
        %1615 = vmatpush1.bf16.msra.mxu0 %v1463
        %1616 = vmatprep.subr.bf16.mxu0 %v1471
        %1617 = vmatpush1.bf16.msra.mxu0 %v1470
        %1618 = vmatprep.subr.bf16.mxu0 %v1478
        %1619 = vmatpush1.bf16.msra.mxu0 %v1477
        %1620 = vmatprep.subr.bf16.mxu0 %v1485
        %1621 = vmatpush1.bf16.msra.mxu0 %v1484
        %1622 = vmatprep.subr.bf16.mxu0 %v1492
        %1623 = vmatpush1.bf16.msra.mxu0 %v1491
        %1624 = vmatprep.subr.bf16.mxu0 %v1499
        %1625 = vmatpush1.bf16.msra.mxu0 %v1498
        %1626 = vmatprep.subr.bf16.mxu0 %v1506
        %1627 = vmatpush1.bf16.msra.mxu0 %v1505
        %1628 = vmatprep.subr.bf16.mxu0 %v1513
        %1629 = vmatpush1.bf16.msra.mxu0 %v1512
        %1630 = vmatprep.subr.bf16.mxu0 0
        %1631 = vmatpush1.bf16.msra.mxu0 0
        %1632 = vmatprep.subr.bf16.mxu0 0
        %1633 = vmatpush1.bf16.msra.mxu0 0
        %1634 = vmatprep.subr.bf16.mxu0 0
        %1635 = vmatpush1.bf16.msra.mxu0 0
        %1636 = vmatprep.subr.bf16.mxu0 0
        %1637 = vmatpush1.bf16.msra.mxu0 0
        %1638 = vmatprep.subr.bf16.mxu0 0
        %1639 = vmatpush1.bf16.msra.mxu0 0
        %1640 = vmatprep.subr.bf16.mxu0 0
        %1641 = vmatpush1.bf16.msra.mxu0 0
        %1642 = vmatprep.subr.bf16.mxu0 0
        %1643 = vmatpush1.bf16.msra.mxu0 0
        %1644 = vmatprep.subr.bf16.mxu0 0
        %1645 = vmatpush1.bf16.msra.mxu0 0
        %1646 = vmatprep.mubr.bf16.mxu0 0
        %1647 = vmatmul.mubr.bf16.gmra.mrb[0].mxu0 %v1183
        %v1648 = vpop.f32.mrb[0].mxu0
        %v1649 = vadd.f32 %v1261, %v1648
        %v1650 = vpop.f32.mrb[0].mxu0
        %v1651 = vadd.f32 %v1265, %v1650
        %v1652 = vpop.f32.mrb[0].mxu0
        %v1653 = vpop.f32.mrb[0].mxu0
        %1654 = vdwg.mxu0
        %1655 = vmatprep.subr.bf16.mxu0 %v1466
        %1656 = vmatpush1.bf16.msra.mxu0 %v1465
        %1657 = vmatprep.subr.bf16.mxu0 %v1473
        %1658 = vmatpush1.bf16.msra.mxu0 %v1472
        %1659 = vmatprep.subr.bf16.mxu0 %v1480
        %1660 = vmatpush1.bf16.msra.mxu0 %v1479
        %1661 = vmatprep.subr.bf16.mxu0 %v1487
        %1662 = vmatpush1.bf16.msra.mxu0 %v1486
        %1663 = vmatprep.subr.bf16.mxu0 %v1494
        %1664 = vmatpush1.bf16.msra.mxu0 %v1493
        %1665 = vmatprep.subr.bf16.mxu0 %v1501
        %1666 = vmatpush1.bf16.msra.mxu0 %v1500
        %1667 = vmatprep.subr.bf16.mxu0 %v1508
        %1668 = vmatpush1.bf16.msra.mxu0 %v1507
        %1669 = vmatprep.subr.bf16.mxu0 %v1515
        %1670 = vmatpush1.bf16.msra.mxu0 %v1514
        %1671 = vmatprep.subr.bf16.mxu0 0
        %1672 = vmatpush1.bf16.msra.mxu0 0
        %1673 = vmatprep.subr.bf16.mxu0 0
        %1674 = vmatpush1.bf16.msra.mxu0 0
        %1675 = vmatprep.subr.bf16.mxu0 0
        %1676 = vmatpush1.bf16.msra.mxu0 0
        %1677 = vmatprep.subr.bf16.mxu0 0
        %1678 = vmatpush1.bf16.msra.mxu0 0
        %1679 = vmatprep.subr.bf16.mxu0 0
        %1680 = vmatpush1.bf16.msra.mxu0 0
        %1681 = vmatprep.subr.bf16.mxu0 0
        %1682 = vmatpush1.bf16.msra.mxu0 0
        %1683 = vmatprep.subr.bf16.mxu0 0
        %1684 = vmatpush1.bf16.msra.mxu0 0
        %1685 = vmatprep.subr.bf16.mxu0 0
        %1686 = vmatpush1.bf16.msra.mxu0 0
        %1687 = vmatprep.mubr.bf16.mxu0 0
        %1688 = vmatmul.mubr.bf16.gmra.mrb[0].mxu0 %v1183
        %v1689 = vpop.f32.mrb[0].mxu0
        %v1690 = vadd.f32 %v1269, %v1689
        %v1691 = vpop.f32.mrb[0].mxu0
        %v1692 = vadd.f32 %v1273, %v1691
        %v1693 = vpop.f32.mrb[0].mxu0
        %v1694 = vpop.f32.mrb[0].mxu0
        %1695 = vdwg.mxu0
        %1696 = vmatprep.subr.bf16.mxu0 0
        %1697 = vmatpush1.bf16.msra.mxu0 %v1467
        %1698 = vmatprep.subr.bf16.mxu0 0
        %1699 = vmatpush1.bf16.msra.mxu0 %v1474
        %1700 = vmatprep.subr.bf16.mxu0 0
        %1701 = vmatpush1.bf16.msra.mxu0 %v1481
        %1702 = vmatprep.subr.bf16.mxu0 0
        %1703 = vmatpush1.bf16.msra.mxu0 %v1488
        %1704 = vmatprep.subr.bf16.mxu0 0
        %1705 = vmatpush1.bf16.msra.mxu0 %v1495
        %1706 = vmatprep.subr.bf16.mxu0 0
        %1707 = vmatpush1.bf16.msra.mxu0 %v1502
        %1708 = vmatprep.subr.bf16.mxu0 0
        %1709 = vmatpush1.bf16.msra.mxu0 %v1509
        %1710 = vmatprep.subr.bf16.mxu0 0
        %1711 = vmatpush1.bf16.msra.mxu0 %v1516
        %1712 = vmatprep.subr.bf16.mxu0 0
        %1713 = vmatpush1.bf16.msra.mxu0 0
        %1714 = vmatprep.subr.bf16.mxu0 0
        %1715 = vmatpush1.bf16.msra.mxu0 0
        %1716 = vmatprep.subr.bf16.mxu0 0
        %1717 = vmatpush1.bf16.msra.mxu0 0
        %1718 = vmatprep.subr.bf16.mxu0 0
        %1719 = vmatpush1.bf16.msra.mxu0 0
        %1720 = vmatprep.subr.bf16.mxu0 0
        %1721 = vmatpush1.bf16.msra.mxu0 0
        %1722 = vmatprep.subr.bf16.mxu0 0
        %1723 = vmatpush1.bf16.msra.mxu0 0
        %1724 = vmatprep.subr.bf16.mxu0 0
        %1725 = vmatpush1.bf16.msra.mxu0 0
        %1726 = vmatprep.subr.bf16.mxu0 0
        %1727 = vmatpush1.bf16.msra.mxu0 0
        %1728 = vmatprep.mubr.bf16.mxu0 0
        %1729 = vmatmul.mubr.bf16.gmra.mrb[0].mxu0 %v1183
        %v1730 = vpop.f32.mrb[0].mxu0
        %v1731 = vadd.f32 %v1277, %v1730
        %v1732 = vpop.f32.mrb[0].mxu0
        %v1733 = vpop.f32.mrb[0].mxu0
        %v1734 = vpop.f32.mrb[0].mxu0
        %1735 = vdwg.mxu0
        %v1736 = vxor.u32 %v1608, 2147483648
        %v1737 = vxor.u32 %v1610, 2147483648
        %v1738 = vxor.u32 %v1649, 2147483648
        %v1739 = vxor.u32 %v1651, 2147483648
        %v1740 = vxor.u32 %v1690, 2147483648
        %v1741 = vxor.u32 %v1692, 2147483648
        %v1742 = vxor.u32 %v1731, 2147483648
        %v1743 = vmul.f32 %v1736, 1.442695
        %v1744 = vpow.pop %v1743
        %v1745 = vmul.f32 %v1737, 1.442695
        %v1746 = vpow.pop %v1745
        %v1747 = vmul.f32 %v1738, 1.442695
        %v1748 = vpow.pop %v1747
        %v1749 = vmul.f32 %v1739, 1.442695
        %v1750 = vpow.pop %v1749
        %v1751 = vmul.f32 %v1740, 1.442695
        %v1752 = vpow.pop %v1751
        %v1753 = vmul.f32 %v1741, 1.442695
        %v1754 = vpow.pop %v1753
        %v1755 = vmul.f32 %v1742, 1.442695
        %v1756 = vpow.pop %v1755
        %v1757 = vadd.f32 %v1744, 1.0
        %v1758 = vadd.f32 %v1746, 1.0
        %v1759 = vadd.f32 %v1748, 1.0
        %v1760 = vadd.f32 %v1750, 1.0
        %v1761 = vadd.f32 %v1752, 1.0
        %v1762 = vadd.f32 %v1754, 1.0
        %v1763 = vadd.f32 %v1756, 1.0
        %v1764 = vrcp.pop %v1757
        %v1765 = vmul.f32 1.0, %v1764
        %v1766 = vrcp.pop %v1758
        %v1767 = vmul.f32 1.0, %v1766
        %v1768 = vrcp.pop %v1759
        %v1769 = vmul.f32 1.0, %v1768
        %v1770 = vrcp.pop %v1760
        %v1771 = vmul.f32 1.0, %v1770
        %v1772 = vrcp.pop %v1761
        %v1773 = vmul.f32 1.0, %v1772
        %v1774 = vrcp.pop %v1762
        %v1775 = vmul.f32 1.0, %v1774
        %v1776 = vrcp.pop %v1763
        %v1777 = vmul.f32 1.0, %v1776
        %v1778 = vpack.c.bf16 %v1765, %v1765
        %v1779 = vpack.c.bf16 %v1767, %v1767
        %v1780 = vpack.c.bf16 %v1769, %v1769
        %v1781 = vpack.c.bf16 %v1771, %v1771
        %v1782 = vpack.c.bf16 %v1773, %v1773
        %v1783 = vpack.c.bf16 %v1775, %v1775
        %v1784 = vpack.c.bf16 %v1777, %v1777
        %v1792 = vunpack.c.l.b16 %v1778
        %v1793 = vunpack.c.l.b16 %v1779
        %v1794 = vunpack.c.l.b16 %v1780
        %v1795 = vunpack.c.l.b16 %v1781
        %v1796 = vunpack.c.l.b16 %v1782
        %v1797 = vunpack.c.l.b16 %v1783
        %v1798 = vunpack.c.l.b16 %v1784
        %v1799 = vpack.c.b16 %v1793, %v1792
        %v1800 = vpack.c.b16 %v1795, %v1794
        %v1801 = vpack.c.b16 %v1797, %v1796
        %v1802 = vpack.c.b16 %v1798, %v1798
        %1807 = vst [vmem:[%s393] sm:$0xff] %v1799
        %1808 = vst [vmem:[%s393 + $0x8] sm:$0xff] %v1800
        %1809 = vst [vmem:[%s393 + $0x10] sm:$0xff] %v1801
        %vm1810 = vcmask 125952
        %1811 = vst.msk [vmem:[%s393 + $0x18] sm:$0xf] %vm1810, %v1802
        %vm1812 = vcmask 162816
        %1813 = vst.msk [vmem:[%s412] sm:$0xff] %vm1812, %v1082
        %s1814 = sand.u32 %s254, 1
        %s1815 = scalar_lea.sflag [#allocation3], %s1814
        %s1816 = sand.u32 %s254, 1
        %s1817 = smul.addr %s1816, 28
        %s1818 = scalar_lea.vmem [#allocation2], %s1817
        %p1819 = scmp.lt.s32.totalorder %s26, 1
        %s1820 = scalar_select %p1819, %s26, 1
        %s1821 = smul.addr %s1820, 8
        %s1822 = scalar_lea.vmem %s11, %s1821
        // Predicated region
        $region61: #{vae_forward.1} parent=59 // pred_check
          %p1823 = pneg %p264
        $region62: #{vae_forward.1} parent=59 // pred_check_branch
          %1825 = sbr.rel (%p1823) target = $region64
        $region63: #{vae_forward.1} parent=59 // pred_region
          %s1827 = ssub.s32 448, 448
          %1828 = vsyncadd %s1815, %s1827
          %s1829 = smul.addr %s26, 7
          %s1830 = smul.addr %s1829, 64
          %s1831 = scalar_lea.hbm %s10, %s1830
          %s1833 = sshll.u32 %s1818, 4
          %s1834 = int_to_ptr.vmem [resolvable:$true] %s1833
          %1836 = dma.vmem_to_hbm [thread:$0]  %s1834, 448, %s1831, %s1815
        $region64: #{vae_forward.1} parent=59 // pred_fallthru
          _
        // Predicated region
        $region65: #{vae_forward.1} parent=59 // pred_check
          %p1837 = pneg %p290
        $region66: #{vae_forward.1} parent=59 // pred_check_branch
          %1839 = sbr.rel (%p1837) target = $region68
        $region67: #{vae_forward.1} parent=59 // pred_region
          _
        $region68: #{vae_forward.1} parent=59 // pred_fallthru
          _
      $region60: #{vae_forward.1} parent=5 // pred_fallthru
        _
      %p1840 = scmp.le.s32.totalorder 2, %s21
      // Predicated region
      $region69: #{vae_forward.1} parent=5 // pred_check
        %p1841 = pneg %p1840
      $region70: #{vae_forward.1} parent=5 // pred_check_branch
        %1843 = sbr.rel (%p1841) target = $region72
      $region71: #{vae_forward.1} parent=5 // pred_region
        %s1844 = ssub.s32 %s21, 2
        // Predicated region
        $region73: #{vae_forward.1} parent=71 // pred_check
          %p1845 = pneg %p270
        $region74: #{vae_forward.1} parent=71 // pred_check_branch
          %1847 = sbr.rel (%p1845) target = $region76
        $region75: #{vae_forward.1} parent=71 // pred_region
          %s1848 = sand.u32 %s255, 1
          %s1849 = scalar_lea.sflag [#allocation3], %s1848
          %s1850 = sand.u32 %s255, 1
          %s1851 = smul.addr %s1850, 28
          %s1852 = scalar_lea.vmem [#allocation2], %s1851
          %1853 = dma.done %s1849, 448
        $region76: #{vae_forward.1} parent=71 // pred_fallthru
          _
        // Predicated region
        $region77: #{vae_forward.1} parent=71 // pred_check
          %p1854 = pneg %p296
        $region78: #{vae_forward.1} parent=71 // pred_check_branch
          %1856 = sbr.rel (%p1854) target = $region80
        $region79: #{vae_forward.1} parent=71 // pred_region
          %p1857 = scmp.lt.s32.totalorder %s27, 1
          %s1858 = scalar_select %p1857, %s27, 1
          %s1859 = smul.addr %s1858, 8
          %s1860 = scalar_lea.vmem %s11, %s1859
        $region80: #{vae_forward.1} parent=71 // pred_fallthru
          _
      $region72: #{vae_forward.1} parent=5 // pred_fallthru
        _
    $region6: #{vae_forward.1} parent=1 // loop_footer
      %s25 = sadd.s32 1, %s21
    $region7: #{vae_forward.1} parent=1 // loop_footer_branch
      %20 = sbr.rel target = $region3
    $region8: #{vae_forward.1} parent=1 // loop_exit
      _
    %1861 = vsyncpa [#allocation3], 1
    %s1862 = scalar_lea.sflag [#allocation3], 1
    %1863 = vsyncpa %s1862, 1

</llo_original>
